<compile_context>
chip_gen: v7x
topology: tpu7x:2x2x1
jax: 0.10.0
libtpu: 0.0.40
codegen_flags: <defaults>
</compile_context>

<pallas_src>
import math

import jax
import jax.numpy as jnp
from jax import lax
from jax.experimental import pallas as pl
from jax.experimental.pallas import tpu as pltpu


# ---------------------------------------------------------------------------
# hardware-aware budgets & tiling
# ---------------------------------------------------------------------------

def _hw_budgets():
    """Generation-aware VMEM budgets (v5e/v6e: 128 MiB, v7x: 64 MiB)."""
    cap = 64 * 1024 * 1024                                   # conservative (v7x)
    try:
        info = pltpu.get_tpu_info()
        cap = int(getattr(info, "vmem_capacity_bytes", cap)) or cap
    except Exception:
        pass
    vmem_limit = int(min((cap * 3) // 4, 112 * 1024 * 1024))
    act_budget = int(cap // 2)
    row_cap = 2048 if cap >= 96 * 1024 * 1024 else 512
    return vmem_limit, act_budget, row_cap


def _pick_row_tile(n_rows, row_bytes, weight_bytes, act_budget, row_cap,
                   force_split=True):
    """Largest MXU-friendly row tile that fits the VMEM budget; leaves >= 2
    grid steps (v7x megacore) whenever the row count allows it."""
    if n_rows <= 8:
        return n_rows                                        # single full block
    avail = max(act_budget - 2 * weight_bytes, 32 * row_bytes)
    t = min(row_cap, avail // (2 * row_bytes), n_rows)
    if force_split:
        t = min(t, -(-n_rows // 2))                          # ceil(n/2) -> >=2 steps
    t = int(t)
    if t >= 256:
        return (t // 256) * 256                              # MXU-aligned M
    return max(8, (t // 8) * 8)


def _pick_n_tile(n, row_bytes, weight_bytes, act_budget, row_cap, force_split):
    """N-tile for K2.  The output block puts tn on the lane axis, so a partial
    tile must be a multiple of 128 (lane-dense stores); otherwise use full N."""
    avail = max(act_budget - 2 * weight_bytes, 32 * row_bytes)
    t = int(min(row_cap, avail // (2 * row_bytes), n))
    if force_split:
        t = min(t, -(-n // 2))
    t = max(128, (t // 128) * 128)
    if t >= n:
        return n
    return t


def _replicated_spec(arr):
    """Whole-array block, same for every grid step (fetched once, reused)."""
    zeros = (0,) * arr.ndim
    return pl.BlockSpec(arr.shape, lambda *_: zeros)


# ---------------------------------------------------------------------------
# kernel bodies
# ---------------------------------------------------------------------------

def _make_mlp_kernel(acts):
    """Fused dense stack on one row tile; acts[l] == apply ReLU after layer l."""
    n = len(acts)

    def kernel(x_ref, *refs):
        o_ref = refs[-1]
        h = x_ref[...]
        for l in range(n):
            w = refs[2 * l][...]
            b = refs[2 * l + 1][...]
            h = jnp.dot(h, w, preferred_element_type=jnp.float32) + b
            if acts[l]:
                h = jnp.maximum(h, 0.0)
        o_ref[...] = h.astype(o_ref.dtype)

    return kernel


def _make_sim_latent_kernel(n_sim, n_latent):
    """Simulator-encoder MLP + latent MLP on one (batch, N-tile) block.

    Ref order after (x, theta_bias):
      (w, b) * n_sim                       simulator encoder
      if n_latent == 1:  wl0_s_T (1, S_out)
      else:              wl0_s, (w, b) * (n_latent - 2), w_last_T (1, H), b_last (1, 1)
      out (1, 1, tn)
    The theta half of latent layer 0 (incl. its bias) arrives pre-computed per
    batch row as `theta_bias`, so no concat / repeat is needed.
    """

    def kernel(x_ref, t_ref, *refs):
        o_ref = refs[-1]
        refs = refs[:-1]
        idx = 0
        h = x_ref[0]                                          # (tn, sim_dim)
        for l in range(n_sim):
            w = refs[idx][...]
            b = refs[idx + 1][...]
            idx += 2
            h = jnp.dot(h, w, preferred_element_type=jnp.float32) + b
            if l < n_sim - 1:
                h = jnp.maximum(h, 0.0)
        t_bias = t_ref[0]                                     # (1, H0)
        if n_latent == 1:
            # single latent layer: (1, S_out) x (tn, S_out)^T -> (1, tn)
            wl0_s_t = refs[idx][...]
            row = lax.dot_general(wl0_s_t, h, (((1,), (1,)), ((), ())),
                                  preferred_element_type=jnp.float32) + t_bias
        else:
            wl0_s = refs[idx][...]
            idx += 1
            h = jnp.dot(h, wl0_s, preferred_element_type=jnp.float32) + t_bias
            h = jnp.maximum(h, 0.0)
            for _ in range(n_latent - 2):
                w = refs[idx][...]
                b = refs[idx + 1][...]
                idx += 2
                h = jnp.dot(h, w, preferred_element_type=jnp.float32) + b
                h = jnp.maximum(h, 0.0)
            w_last_t = refs[idx][...]                         # (1, H_last)
            b_last = refs[idx + 1][...]                       # (1, 1)
            # transposed contraction -> lane-dense (1, tn) output row
            row = lax.dot_general(w_last_t, h, (((1,), (1,)), ((), ())),
                                  preferred_element_type=jnp.float32) + b_last
        o_ref[0] = row.astype(o_ref.dtype)

    return kernel


# ---------------------------------------------------------------------------
# pallas_call wrappers
# ---------------------------------------------------------------------------

def _theta_bias_forward(theta, theta_layers, wl0_t, bl0,
                        vmem_limit, act_budget, row_cap):
    """K1: theta_bias = MLP_theta(theta) @ Wl0_theta + bl0   -> (B, H0)."""
    layers = list(theta_layers) + [(wl0_t, bl0)]
    acts = [True] * (len(theta_layers) - 1) + [False, False]
    B, d_in = theta.shape
    d_out = wl0_t.shape[1]

    widths = [d_in] + [w.shape[1] for w, _ in layers]
    row_bytes = 4 * sum(widths)
    weight_bytes = sum(4 * (w.size + b.size) for w, b in layers)
    tb = _pick_row_tile(B, row_bytes, weight_bytes, act_budget, row_cap,
                        force_split=True)

    in_specs = [pl.BlockSpec((tb, d_in), lambda i: (i, 0))]
    args = [theta]
    for w, b in layers:
        in_specs += [_replicated_spec(w), _replicated_spec(b)]
        args += [w, b]

    return pl.pallas_call(
        _make_mlp_kernel(tuple(acts)),
        out_shape=jax.ShapeDtypeStruct((B, d_out), theta.dtype),
        grid_spec=pltpu.PrefetchScalarGridSpec(
            num_scalar_prefetch=0,
            grid=(pl.cdiv(B, tb),),
            in_specs=in_specs,
            out_specs=pl.BlockSpec((tb, d_out), lambda i: (i, 0)),
        ),
        compiler_params=pltpu.CompilerParams(
            dimension_semantics=("parallel",),
            vmem_limit_bytes=vmem_limit,
        ),
    )(*args)


def _sim_latent_forward(x_target, theta_bias, sim_layers, wl0_s, latent_tail,
                        vmem_limit, act_budget, row_cap):
    """K2: simulator-encoder + latent MLP over a (batch, N-tile) grid.

    Returns (B, 1, N); reshaped to (B, N, 1) by the caller (free)."""
    B, N, sim_dim = x_target.shape
    n_sim = len(sim_layers)
    n_latent = 1 + len(latent_tail)
    h0 = theta_bias.shape[-1]
    theta_bias3 = theta_bias[:, None, :]                      # (B, 1, H0)

    # weight list in the kernel's expected order
    wargs = []
    for w, b in sim_layers:
        wargs += [w, b]
    if n_latent == 1:
        wargs += [wl0_s.T]                                    # (1, S_out)
    else:
        wargs += [wl0_s]
        for w, b in latent_tail[:-1]:
            wargs += [w, b]
        w_last, b_last = latent_tail[-1]
        wargs += [w_last.T, b_last]                           # (1, H_last), (1, 1)

    widths = ([sim_dim] + [w.shape[1] for w, _ in sim_layers]
              + [wl0_s.shape[1]] + [w.shape[1] for w, _ in latent_tail])
    row_bytes = 4 * sum(widths)
    weight_bytes = sum(4 * a.size for a in wargs)
    tn = _pick_n_tile(N, row_bytes, weight_bytes, act_budget, row_cap,
                      force_split=(B == 1))

    in_specs = [
        pl.BlockSpec((1, tn, sim_dim), lambda b, n: (b, n, 0)),
        pl.BlockSpec((1, 1, h0), lambda b, n: (b, 0, 0)),
    ]
    in_specs += [_replicated_spec(a) for a in wargs]

    out = pl.pallas_call(
        _make_sim_latent_kernel(n_sim, n_latent),
        out_shape=jax.ShapeDtypeStruct((B, 1, N), x_target.dtype),
        grid_spec=pltpu.PrefetchScalarGridSpec(
            num_scalar_prefetch=0,
            grid=(B, pl.cdiv(N, tn)),
            in_specs=in_specs,
            out_specs=pl.BlockSpec((1, 1, tn), lambda b, n: (b, 0, n)),
        ),
        compiler_params=pltpu.CompilerParams(
            dimension_semantics=("parallel", "parallel"),
            vmem_limit_bytes=vmem_limit,
        ),
    )(x_target, theta_bias3, *wargs)
    return out


@jax.jit
def sbi_network_forward(params, theta, x_target, time_repr=None):
    """Pallas-backed SBINetwork.forward.

    theta:    (B, theta_dim)  or (theta_dim,)
    x_target: (B, N, sim_dim) or (N, sim_dim)
    returns:  (B, N, 1)       or (N, 1)
    """
    # TODO(synk): optional time_encoder branch not implemented (disabled in this
    # config); it would reuse the same split-weight / per-batch-bias pattern.
    if time_repr is not None:
        raise NotImplementedError("time_encoder branch is disabled in this config")

    batched = theta.ndim == 2
    if not batched:
        theta = theta[None]
        x_target = x_target[None]

    B, _ = theta.shape
    _, n_target, _ = x_target.shape

    vmem_limit, act_budget, row_cap = _hw_budgets()

    # split latent layer 0: cat([t, s]) @ Wl0 == t @ Wl0[:T_out] + s @ Wl0[T_out:]
    t_out = params["theta_encoder"][-1][0].shape[1]
    wl0, bl0 = params["latent_mlp"][0]
    wl0_t, wl0_s = wl0[:t_out], wl0[t_out:]
    latent_tail = list(params["latent_mlp"][1:])

    theta_bias = _theta_bias_forward(theta, params["theta_encoder"], wl0_t, bl0,
                                     vmem_limit, act_budget, row_cap)      # (B, H0)
    out = _sim_latent_forward(x_target, theta_bias, params["simulator_encoder"],
                              wl0_s, latent_tail,
                              vmem_limit, act_budget, row_cap)             # (B, 1, N)

    res = out.reshape(B, n_target, 1)            # (B,1,N)->(B,N,1): metadata only
    if not batched:
        res = res[0]
    return res


# ---------------------------------------------------------------------------
# init + pure-JAX reference + demo
# ---------------------------------------------------------------------------

def _init_linear(key, fan_in, fan_out, dtype=jnp.float32):
    """PyTorch nn.Linear default init; weights stored (in, out), bias (1, out)."""
    kw, kb = jax.random.split(key)
    bound = 1.0 / math.sqrt(fan_in)
    w = jax.random.uniform(kw, (fan_in, fan_out), dtype, minval=-bound, maxval=bound)
    b = jax.random.uniform(kb, (1, fan_out), dtype, minval=-bound, maxval=bound)
    return w, b


def _init_mlp(key, dims):
    keys = jax.random.split(key, len(dims) - 1)
    return [_init_linear(k, fi, fo) for k, fi, fo in zip(keys, dims[:-1], dims[1:])]


def _ref_mlp(x, layers):
    h = x
    for i, (w, b) in enumerate(layers):
        h = h @ w + b
        if i < len(layers) - 1:
            h = jnp.maximum(h, 0.0)
    return h


def _ref_sbi_forward(params, theta, x_target):
    t_enc = _ref_mlp(theta, params["theta_encoder"])
    s_enc = _ref_mlp(x_target, params["simulator_encoder"])
    n_t = x_target.shape[-2]
    t_rep = jnp.broadcast_to(t_enc[:, None, :],
                             (theta.shape[0], n_t, t_enc.shape[-1]))
    latent_in = jnp.concatenate([t_rep, s_enc], axis=-1)
    return _ref_mlp(latent_in, params["latent_mlp"])


if __name__ == "__main__":
    # SBINetwork config:
    #   theta_dim=16, simulator_out_dim=24
    #   theta_encoder:     architecture=[64, 64], output_dim=32, ReLU, no final act
    #   simulator_encoder: architecture=[64, 64], output_dim=32, ReLU, no final act
    #   latent_mlp:        architecture=[128, 64], output_dim=1,  ReLU, no final act
    #   time_encoder: disabled
    theta_dim, sim_dim = 16, 24
    theta_out, sim_out = 32, 32

    key = jax.random.PRNGKey(0)
    k_theta, k_x, k1, k2, k3 = jax.random.split(key, 5)

    params = {
        "theta_encoder": _init_mlp(k1, [theta_dim, 64, 64, theta_out]),
        "simulator_encoder": _init_mlp(k2, [sim_dim, 64, 64, sim_out]),
        "latent_mlp": _init_mlp(k3, [theta_out + sim_out, 128, 64, 1]),
    }

    # test 1: batched, exact tiles
    batch, n_target = 4, 8
    theta = jax.random.normal(k_theta, (batch, theta_dim), jnp.float32)
    x_target = jax.random.normal(k_x, (batch, n_target, sim_dim), jnp.float32)
    out = jax.block_until_ready(sbi_network_forward(params, theta, x_target))
    ref = _ref_sbi_forward(params, theta, x_target)
    assert out.shape == (batch, n_target, 1), out.shape
    assert jnp.allclose(out, ref, atol=1e-3, rtol=1e-3), \
        f"max abs err = {float(jnp.max(jnp.abs(out - ref)))}"

    # test 2: batched, ragged batch / n_target (exercises pad-free partial blocks)
    batch2, n_target2 = 3, 20
    theta2 = jax.random.normal(jax.random.PRNGKey(7), (batch2, theta_dim), jnp.float32)
    x2 = jax.random.normal(jax.random.PRNGKey(8), (batch2, n_target2, sim_dim), jnp.float32)
    out2 = jax.block_until_ready(sbi_network_forward(params, theta2, x2))
    ref2 = _ref_sbi_forward(params, theta2, x2)
    assert out2.shape == (batch2, n_target2, 1), out2.shape
    assert jnp.allclose(out2, ref2, atol=1e-3, rtol=1e-3), \
        f"max abs err = {float(jnp.max(jnp.abs(out2 - ref2)))}"

    # test 3: unbatched path
    out3 = jax.block_until_ready(
        sbi_network_forward(params, theta[0], x_target[0]))
    assert out3.shape == (n_target, 1), out3.shape
    assert jnp.allclose(out3, ref[0], atol=1e-3, rtol=1e-3)

    print("KERNEL_OK")
</pallas_src>

<mosaic_0001>
module attributes {stable_mosaic.version = 11 : i64} {
  func.func @kernel(%arg0: i32, %arg1: memref<4x16xf32, #tpu.memory_space<vmem>>, %arg2: memref<16x64xf32, #tpu.memory_space<vmem>>, %arg3: memref<1x64xf32, #tpu.memory_space<vmem>>, %arg4: memref<64x64xf32, #tpu.memory_space<vmem>>, %arg5: memref<1x64xf32, #tpu.memory_space<vmem>>, %arg6: memref<64x32xf32, #tpu.memory_space<vmem>>, %arg7: memref<1x32xf32, #tpu.memory_space<vmem>>, %arg8: memref<32x128xf32, #tpu.memory_space<vmem>>, %arg9: memref<1x128xf32, #tpu.memory_space<vmem>>, %arg10: memref<4x128xf32, #tpu.memory_space<vmem>>) attributes {dimension_semantics = [#tpu.dimension_semantics<parallel>], iteration_bounds = array<i64: 1>, scalar_prefetch = 0 : i64, scratch_operands = 0 : i64, tpu.core_type = #tpu.core_type<tc>, window_params = [{transform_indices = @transform_0, window_bounds = array<i64: 4, 16>}, {pipeline_mode = #tpu.pipeline_mode<synchronous>, transform_indices = @transform_1, window_bounds = array<i64: 16, 64>}, {pipeline_mode = #tpu.pipeline_mode<synchronous>, transform_indices = @transform_2, window_bounds = array<i64: 1, 64>}, {pipeline_mode = #tpu.pipeline_mode<synchronous>, transform_indices = @transform_3, window_bounds = array<i64: 64, 64>}, {pipeline_mode = #tpu.pipeline_mode<synchronous>, transform_indices = @transform_4, window_bounds = array<i64: 1, 64>}, {pipeline_mode = #tpu.pipeline_mode<synchronous>, transform_indices = @transform_5, window_bounds = array<i64: 64, 32>}, {pipeline_mode = #tpu.pipeline_mode<synchronous>, transform_indices = @transform_6, window_bounds = array<i64: 1, 32>}, {pipeline_mode = #tpu.pipeline_mode<synchronous>, transform_indices = @transform_7, window_bounds = array<i64: 32, 128>}, {pipeline_mode = #tpu.pipeline_mode<synchronous>, transform_indices = @transform_8, window_bounds = array<i64: 1, 128>}, {transform_indices = @transform_9, window_bounds = array<i64: 4, 128>}]} {
    %c0 = arith.constant 0 : index
    %c0_0 = arith.constant 0 : index
    %0 = vector.load %arg1[%c0, %c0_0] : memref<4x16xf32, #tpu.memory_space<vmem>>, vector<4x16xf32>
    %c0_1 = arith.constant 0 : index
    %c0_2 = arith.constant 0 : index
    %1 = vector.load %arg2[%c0_1, %c0_2] : memref<16x64xf32, #tpu.memory_space<vmem>>, vector<16x64xf32>
    %c0_3 = arith.constant 0 : index
    %c0_4 = arith.constant 0 : index
    %2 = vector.load %arg3[%c0_3, %c0_4] : memref<1x64xf32, #tpu.memory_space<vmem>>, vector<1x64xf32>
    %cst = arith.constant dense<0.000000e+00> : vector<4x64xf32>
    %3 = tpu.matmul %0, %1, %cst {dimension_numbers = #tpu.dot_dimension_numbers<[1], [0], [0], [1], [0, 0, 1, 1], [], []>} : vector<4x16xf32>, vector<16x64xf32>, vector<4x64xf32> -> vector<4x64xf32>
    %4 = vector.broadcast %2 : vector<1x64xf32> to vector<4x64xf32>
    %5 = arith.addf %3, %4 : vector<4x64xf32>
    %cst_5 = arith.constant 0.000000e+00 : f32
    %6 = vector.broadcast %cst_5 : f32 to vector<4x64xf32>
    %7 = arith.maximumf %5, %6 : vector<4x64xf32>
    %c0_6 = arith.constant 0 : index
    %c0_7 = arith.constant 0 : index
    %8 = vector.load %arg4[%c0_6, %c0_7] : memref<64x64xf32, #tpu.memory_space<vmem>>, vector<64x64xf32>
    %c0_8 = arith.constant 0 : index
    %c0_9 = arith.constant 0 : index
    %9 = vector.load %arg5[%c0_8, %c0_9] : memref<1x64xf32, #tpu.memory_space<vmem>>, vector<1x64xf32>
    %cst_10 = arith.constant dense<0.000000e+00> : vector<4x64xf32>
    %10 = tpu.matmul %7, %8, %cst_10 {dimension_numbers = #tpu.dot_dimension_numbers<[1], [0], [0], [1], [0, 0, 1, 1], [], []>} : vector<4x64xf32>, vector<64x64xf32>, vector<4x64xf32> -> vector<4x64xf32>
    %11 = vector.broadcast %9 : vector<1x64xf32> to vector<4x64xf32>
    %12 = arith.addf %10, %11 : vector<4x64xf32>
    %cst_11 = arith.constant 0.000000e+00 : f32
    %13 = vector.broadcast %cst_11 : f32 to vector<4x64xf32>
    %14 = arith.maximumf %12, %13 : vector<4x64xf32>
    %c0_12 = arith.constant 0 : index
    %c0_13 = arith.constant 0 : index
    %15 = vector.load %arg6[%c0_12, %c0_13] : memref<64x32xf32, #tpu.memory_space<vmem>>, vector<64x32xf32>
    %c0_14 = arith.constant 0 : index
    %c0_15 = arith.constant 0 : index
    %16 = vector.load %arg7[%c0_14, %c0_15] : memref<1x32xf32, #tpu.memory_space<vmem>>, vector<1x32xf32>
    %cst_16 = arith.constant dense<0.000000e+00> : vector<4x32xf32>
    %17 = tpu.matmul %14, %15, %cst_16 {dimension_numbers = #tpu.dot_dimension_numbers<[1], [0], [0], [1], [0, 0, 1, 1], [], []>} : vector<4x64xf32>, vector<64x32xf32>, vector<4x32xf32> -> vector<4x32xf32>
    %18 = vector.broadcast %16 : vector<1x32xf32> to vector<4x32xf32>
    %19 = arith.addf %17, %18 : vector<4x32xf32>
    %c0_17 = arith.constant 0 : index
    %c0_18 = arith.constant 0 : index
    %20 = vector.load %arg8[%c0_17, %c0_18] : memref<32x128xf32, #tpu.memory_space<vmem>>, vector<32x128xf32>
    %c0_19 = arith.constant 0 : index
    %c0_20 = arith.constant 0 : index
    %21 = vector.load %arg9[%c0_19, %c0_20] : memref<1x128xf32, #tpu.memory_space<vmem>>, vector<1x128xf32>
    %cst_21 = arith.constant dense<0.000000e+00> : vector<4x128xf32>
    %22 = tpu.matmul %19, %20, %cst_21 {dimension_numbers = #tpu.dot_dimension_numbers<[1], [0], [0], [1], [0, 0, 1, 1], [], []>} : vector<4x32xf32>, vector<32x128xf32>, vector<4x128xf32> -> vector<4x128xf32>
    %23 = vector.broadcast %21 : vector<1x128xf32> to vector<4x128xf32>
    %24 = arith.addf %22, %23 : vector<4x128xf32>
    %c0_22 = arith.constant 0 : index
    %c0_23 = arith.constant 0 : index
    %25 = vector.load %arg10[%c0_22, %c0_23] : memref<4x128xf32, #tpu.memory_space<vmem>>, vector<4x128xf32>
    tpu.vector_store %arg10[%c0_22, %c0_23], %24 {strides = array<i32>} : memref<4x128xf32, #tpu.memory_space<vmem>>, vector<4x128xf32>,
    return
  }
  func.func @transform_0(%arg0: i32) -> (i32, i32) {
    %c0_i32 = arith.constant 0 : i32
    %c0_i32_0 = arith.constant 0 : i32
    return %arg0, %c0_i32 : i32, i32
  }
  func.func @transform_1(%arg0: i32) -> (i32, i32) {
    %c0_i32 = arith.constant 0 : i32
    %c0_i32_0 = arith.constant 0 : i32
    %c0_i32_1 = arith.constant 0 : i32
    return %c0_i32, %c0_i32_0 : i32, i32
  }
  func.func @transform_2(%arg0: i32) -> (i32, i32) {
    %c0_i32 = arith.constant 0 : i32
    %c0_i32_0 = arith.constant 0 : i32
    %c0_i32_1 = arith.constant 0 : i32
    return %c0_i32, %c0_i32_0 : i32, i32
  }
  func.func @transform_3(%arg0: i32) -> (i32, i32) {
    %c0_i32 = arith.constant 0 : i32
    %c0_i32_0 = arith.constant 0 : i32
    %c0_i32_1 = arith.constant 0 : i32
    return %c0_i32, %c0_i32_0 : i32, i32
  }
  func.func @transform_4(%arg0: i32) -> (i32, i32) {
    %c0_i32 = arith.constant 0 : i32
    %c0_i32_0 = arith.constant 0 : i32
    %c0_i32_1 = arith.constant 0 : i32
    return %c0_i32, %c0_i32_0 : i32, i32
  }
  func.func @transform_5(%arg0: i32) -> (i32, i32) {
    %c0_i32 = arith.constant 0 : i32
    %c0_i32_0 = arith.constant 0 : i32
    %c0_i32_1 = arith.constant 0 : i32
    return %c0_i32, %c0_i32_0 : i32, i32
  }
  func.func @transform_6(%arg0: i32) -> (i32, i32) {
    %c0_i32 = arith.constant 0 : i32
    %c0_i32_0 = arith.constant 0 : i32
    %c0_i32_1 = arith.constant 0 : i32
    return %c0_i32, %c0_i32_0 : i32, i32
  }
  func.func @transform_7(%arg0: i32) -> (i32, i32) {
    %c0_i32 = arith.constant 0 : i32
    %c0_i32_0 = arith.constant 0 : i32
    %c0_i32_1 = arith.constant 0 : i32
    return %c0_i32, %c0_i32_0 : i32, i32
  }
  func.func @transform_8(%arg0: i32) -> (i32, i32) {
    %c0_i32 = arith.constant 0 : i32
    %c0_i32_0 = arith.constant 0 : i32
    %c0_i32_1 = arith.constant 0 : i32
    return %c0_i32, %c0_i32_0 : i32, i32
  }
  func.func @transform_9(%arg0: i32) -> (i32, i32) {
    %c0_i32 = arith.constant 0 : i32
    %c0_i32_0 = arith.constant 0 : i32
    return %arg0, %c0_i32 : i32, i32
  }
}

module attributes {stable_mosaic.version = 11 : i64} {
  func.func @kernel(%arg0: i32, %arg1: i32, %arg2: memref<1x8x24xf32, #tpu.memory_space<vmem>>, %arg3: memref<1x1x128xf32, #tpu.memory_space<vmem>>, %arg4: memref<24x64xf32, #tpu.memory_space<vmem>>, %arg5: memref<1x64xf32, #tpu.memory_space<vmem>>, %arg6: memref<64x64xf32, #tpu.memory_space<vmem>>, %arg7: memref<1x64xf32, #tpu.memory_space<vmem>>, %arg8: memref<64x32xf32, #tpu.memory_space<vmem>>, %arg9: memref<1x32xf32, #tpu.memory_space<vmem>>, %arg10: memref<32x128xf32, #tpu.memory_space<vmem>>, %arg11: memref<128x64xf32, #tpu.memory_space<vmem>>, %arg12: memref<1x64xf32, #tpu.memory_space<vmem>>, %arg13: memref<1x64xf32, #tpu.memory_space<vmem>>, %arg14: memref<1x1xf32, #tpu.memory_space<vmem>>, %arg15: memref<1x1x8xf32, #tpu.memory_space<vmem>>) attributes {dimension_semantics = [#tpu.dimension_semantics<parallel>, #tpu.dimension_semantics<parallel>], iteration_bounds = array<i64: 4, 1>, scalar_prefetch = 0 : i64, scratch_operands = 0 : i64, tpu.core_type = #tpu.core_type<tc>, window_params = [{transform_indices = @transform_0, window_bounds = array<i64: 1, 8, 24>}, {transform_indices = @transform_1, window_bounds = array<i64: 1, 1, 128>}, {pipeline_mode = #tpu.pipeline_mode<synchronous>, transform_indices = @transform_2, window_bounds = array<i64: 24, 64>}, {pipeline_mode = #tpu.pipeline_mode<synchronous>, transform_indices = @transform_3, window_bounds = array<i64: 1, 64>}, {pipeline_mode = #tpu.pipeline_mode<synchronous>, transform_indices = @transform_4, window_bounds = array<i64: 64, 64>}, {pipeline_mode = #tpu.pipeline_mode<synchronous>, transform_indices = @transform_5, window_bounds = array<i64: 1, 64>}, {pipeline_mode = #tpu.pipeline_mode<synchronous>, transform_indices = @transform_6, window_bounds = array<i64: 64, 32>}, {pipeline_mode = #tpu.pipeline_mode<synchronous>, transform_indices = @transform_7, window_bounds = array<i64: 1, 32>}, {pipeline_mode = #tpu.pipeline_mode<synchronous>, transform_indices = @transform_8, window_bounds = array<i64: 32, 128>}, {pipeline_mode = #tpu.pipeline_mode<synchronous>, transform_indices = @transform_9, window_bounds = array<i64: 128, 64>}, {pipeline_mode = #tpu.pipeline_mode<synchronous>, transform_indices = @transform_10, window_bounds = array<i64: 1, 64>}, {pipeline_mode = #tpu.pipeline_mode<synchronous>, transform_indices = @transform_11, window_bounds = array<i64: 1, 64>}, {pipeline_mode = #tpu.pipeline_mode<synchronous>, transform_indices = @transform_12, window_bounds = array<i64: 1, 1>}, {transform_indices = @transform_13, window_bounds = array<i64: 1, 1, 8>}]} {
    %c0 = arith.constant 0 : index
    %c0_0 = arith.constant 0 : index
    %c0_1 = arith.constant 0 : index
    %0 = vector.load %arg2[%c0, %c0_0, %c0_1] : memref<1x8x24xf32, #tpu.memory_space<vmem>>, vector<1x8x24xf32>
    %1 = vector.shape_cast %0 : vector<1x8x24xf32> to vector<8x24xf32>
    %c0_2 = arith.constant 0 : index
    %c0_3 = arith.constant 0 : index
    %2 = vector.load %arg4[%c0_2, %c0_3] : memref<24x64xf32, #tpu.memory_space<vmem>>, vector<24x64xf32>
    %c0_4 = arith.constant 0 : index
    %c0_5 = arith.constant 0 : index
    %3 = vector.load %arg5[%c0_4, %c0_5] : memref<1x64xf32, #tpu.memory_space<vmem>>, vector<1x64xf32>
    %cst = arith.constant dense<0.000000e+00> : vector<8x64xf32>
    %4 = tpu.matmul %1, %2, %cst {dimension_numbers = #tpu.dot_dimension_numbers<[1], [0], [0], [1], [0, 0, 1, 1], [], []>} : vector<8x24xf32>, vector<24x64xf32>, vector<8x64xf32> -> vector<8x64xf32>
    %5 = vector.broadcast %3 : vector<1x64xf32> to vector<8x64xf32>
    %6 = arith.addf %4, %5 : vector<8x64xf32>
    %cst_6 = arith.constant 0.000000e+00 : f32
    %7 = vector.broadcast %cst_6 : f32 to vector<8x64xf32>
    %8 = arith.maximumf %6, %7 : vector<8x64xf32>
    %c0_7 = arith.constant 0 : index
    %c0_8 = arith.constant 0 : index
    %9 = vector.load %arg6[%c0_7, %c0_8] : memref<64x64xf32, #tpu.memory_space<vmem>>, vector<64x64xf32>
    %c0_9 = arith.constant 0 : index
    %c0_10 = arith.constant 0 : index
    %10 = vector.load %arg7[%c0_9, %c0_10] : memref<1x64xf32, #tpu.memory_space<vmem>>, vector<1x64xf32>
    %cst_11 = arith.constant dense<0.000000e+00> : vector<8x64xf32>
    %11 = tpu.matmul %8, %9, %cst_11 {dimension_numbers = #tpu.dot_dimension_numbers<[1], [0], [0], [1], [0, 0, 1, 1], [], []>} : vector<8x64xf32>, vector<64x64xf32>, vector<8x64xf32> -> vector<8x64xf32>
    %12 = vector.broadcast %10 : vector<1x64xf32> to vector<8x64xf32>
    %13 = arith.addf %11, %12 : vector<8x64xf32>
    %cst_12 = arith.constant 0.000000e+00 : f32
    %14 = vector.broadcast %cst_12 : f32 to vector<8x64xf32>
    %15 = arith.maximumf %13, %14 : vector<8x64xf32>
    %c0_13 = arith.constant 0 : index
    %c0_14 = arith.constant 0 : index
    %16 = vector.load %arg8[%c0_13, %c0_14] : memref<64x32xf32, #tpu.memory_space<vmem>>, vector<64x32xf32>
    %c0_15 = arith.constant 0 : index
    %c0_16 = arith.constant 0 : index
    %17 = vector.load %arg9[%c0_15, %c0_16] : memref<1x32xf32, #tpu.memory_space<vmem>>, vector<1x32xf32>
    %cst_17 = arith.constant dense<0.000000e+00> : vector<8x32xf32>
    %18 = tpu.matmul %15, %16, %cst_17 {dimension_numbers = #tpu.dot_dimension_numbers<[1], [0], [0], [1], [0, 0, 1, 1], [], []>} : vector<8x64xf32>, vector<64x32xf32>, vector<8x32xf32> -> vector<8x32xf32>
    %19 = vector.broadcast %17 : vector<1x32xf32> to vector<8x32xf32>
    %20 = arith.addf %18, %19 : vector<8x32xf32>
    %c0_18 = arith.constant 0 : index
    %c0_19 = arith.constant 0 : index
    %c0_20 = arith.constant 0 : index
    %21 = vector.load %arg3[%c0_18, %c0_19, %c0_20] : memref<1x1x128xf32, #tpu.memory_space<vmem>>, vector<1x1x128xf32>
    %22 = vector.shape_cast %21 : vector<1x1x128xf32> to vector<1x128xf32>
    %c0_21 = arith.constant 0 : index
    %c0_22 = arith.constant 0 : index
    %23 = vector.load %arg10[%c0_21, %c0_22] : memref<32x128xf32, #tpu.memory_space<vmem>>, vector<32x128xf32>
    %cst_23 = arith.constant dense<0.000000e+00> : vector<8x128xf32>
    %24 = tpu.matmul %20, %23, %cst_23 {dimension_numbers = #tpu.dot_dimension_numbers<[1], [0], [0], [1], [0, 0, 1, 1], [], []>} : vector<8x32xf32>, vector<32x128xf32>, vector<8x128xf32> -> vector<8x128xf32>
    %25 = vector.broadcast %22 : vector<1x128xf32> to vector<8x128xf32>
    %26 = arith.addf %24, %25 : vector<8x128xf32>
    %cst_24 = arith.constant 0.000000e+00 : f32
    %27 = vector.broadcast %cst_24 : f32 to vector<8x128xf32>
    %28 = arith.maximumf %26, %27 : vector<8x128xf32>
    %c0_25 = arith.constant 0 : index
    %c0_26 = arith.constant 0 : index
    %29 = vector.load %arg11[%c0_25, %c0_26] : memref<128x64xf32, #tpu.memory_space<vmem>>, vector<128x64xf32>
    %c0_27 = arith.constant 0 : index
    %c0_28 = arith.constant 0 : index
    %30 = vector.load %arg12[%c0_27, %c0_28] : memref<1x64xf32, #tpu.memory_space<vmem>>, vector<1x64xf32>
    %cst_29 = arith.constant dense<0.000000e+00> : vector<8x64xf32>
    %31 = tpu.matmul %28, %29, %cst_29 {dimension_numbers = #tpu.dot_dimension_numbers<[1], [0], [0], [1], [0, 0, 1, 1], [], []>} : vector<8x128xf32>, vector<128x64xf32>, vector<8x64xf32> -> vector<8x64xf32>
    %32 = vector.broadcast %30 : vector<1x64xf32> to vector<8x64xf32>
    %33 = arith.addf %31, %32 : vector<8x64xf32>
    %cst_30 = arith.constant 0.000000e+00 : f32
    %34 = vector.broadcast %cst_30 : f32 to vector<8x64xf32>
    %35 = arith.maximumf %33, %34 : vector<8x64xf32>
    %c0_31 = arith.constant 0 : index
    %c0_32 = arith.constant 0 : index
    %36 = vector.load %arg13[%c0_31, %c0_32] : memref<1x64xf32, #tpu.memory_space<vmem>>, vector<1x64xf32>
    %c0_33 = arith.constant 0 : index
    %c0_34 = arith.constant 0 : index
    %37 = vector.load %arg14[%c0_33, %c0_34] : memref<1x1xf32, #tpu.memory_space<vmem>>, vector<1x1xf32>
    %cst_35 = arith.constant dense<0.000000e+00> : vector<1x8xf32>
    %38 = tpu.matmul %36, %35, %cst_35 {dimension_numbers = #tpu.dot_dimension_numbers<[1], [1], [0], [0], [0, 0, 1, 0], [], []>} : vector<1x64xf32>, vector<8x64xf32>, vector<1x8xf32> -> vector<1x8xf32>
    %39 = vector.broadcast %37 : vector<1x1xf32> to vector<1x8xf32>
    %40 = arith.addf %38, %39 : vector<1x8xf32>
    %c0_36 = arith.constant 0 : index
    %c0_37 = arith.constant 0 : index
    %c0_38 = arith.constant 0 : index
    %41 = vector.load %arg15[%c0_36, %c0_37, %c0_38] : memref<1x1x8xf32, #tpu.memory_space<vmem>>, vector<1x1x8xf32>
    %42 = vector.shape_cast %41 : vector<1x1x8xf32> to vector<1x8xf32>
    %43 = vector.shape_cast %40 : vector<1x8xf32> to vector<1x1x8xf32>
    tpu.vector_store %arg15[%c0_36, %c0_37, %c0_38], %43 {strides = array<i32>} : memref<1x1x8xf32, #tpu.memory_space<vmem>>, vector<1x1x8xf32>,
    return
  }
  func.func @transform_0(%arg0: i32, %arg1: i32) -> (i32, i32, i32) {
    %c0_i32 = arith.constant 0 : i32
    %c0_i32_0 = arith.constant 0 : i32
    return %arg0, %arg1, %c0_i32 : i32, i32, i32
  }
  func.func @transform_1(%arg0: i32, %arg1: i32) -> (i32, i32, i32) {
    %c0_i32 = arith.constant 0 : i32
    %c0_i32_0 = arith.constant 0 : i32
    %c0_i32_1 = arith.constant 0 : i32
    return %arg0, %c0_i32, %c0_i32_0 : i32, i32, i32
  }
  func.func @transform_2(%arg0: i32, %arg1: i32) -> (i32, i32) {
    %c0_i32 = arith.constant 0 : i32
    %c0_i32_0 = arith.constant 0 : i32
    %c0_i32_1 = arith.constant 0 : i32
    return %c0_i32, %c0_i32_0 : i32, i32
  }
  func.func @transform_3(%arg0: i32, %arg1: i32) -> (i32, i32) {
    %c0_i32 = arith.constant 0 : i32
    %c0_i32_0 = arith.constant 0 : i32
    %c0_i32_1 = arith.constant 0 : i32
    return %c0_i32, %c0_i32_0 : i32, i32
  }
  func.func @transform_4(%arg0: i32, %arg1: i32) -> (i32, i32) {
    %c0_i32 = arith.constant 0 : i32
    %c0_i32_0 = arith.constant 0 : i32
    %c0_i32_1 = arith.constant 0 : i32
    return %c0_i32, %c0_i32_0 : i32, i32
  }
  func.func @transform_5(%arg0: i32, %arg1: i32) -> (i32, i32) {
    %c0_i32 = arith.constant 0 : i32
    %c0_i32_0 = arith.constant 0 : i32
    %c0_i32_1 = arith.constant 0 : i32
    return %c0_i32, %c0_i32_0 : i32, i32
  }
  func.func @transform_6(%arg0: i32, %arg1: i32) -> (i32, i32) {
    %c0_i32 = arith.constant 0 : i32
    %c0_i32_0 = arith.constant 0 : i32
    %c0_i32_1 = arith.constant 0 : i32
    return %c0_i32, %c0_i32_0 : i32, i32
  }
  func.func @transform_7(%arg0: i32, %arg1: i32) -> (i32, i32) {
    %c0_i32 = arith.constant 0 : i32
    %c0_i32_0 = arith.constant 0 : i32
    %c0_i32_1 = arith.constant 0 : i32
    return %c0_i32, %c0_i32_0 : i32, i32
  }
  func.func @transform_8(%arg0: i32, %arg1: i32) -> (i32, i32) {
    %c0_i32 = arith.constant 0 : i32
    %c0_i32_0 = arith.constant 0 : i32
    %c0_i32_1 = arith.constant 0 : i32
    return %c0_i32, %c0_i32_0 : i32, i32
  }
  func.func @transform_9(%arg0: i32, %arg1: i32) -> (i32, i32) {
    %c0_i32 = arith.constant 0 : i32
    %c0_i32_0 = arith.constant 0 : i32
    %c0_i32_1 = arith.constant 0 : i32
    return %c0_i32, %c0_i32_0 : i32, i32
  }
  func.func @transform_10(%arg0: i32, %arg1: i32) -> (i32, i32) {
    %c0_i32 = arith.constant 0 : i32
    %c0_i32_0 = arith.constant 0 : i32
    %c0_i32_1 = arith.constant 0 : i32
    return %c0_i32, %c0_i32_0 : i32, i32
  }
  func.func @transform_11(%arg0: i32, %arg1: i32) -> (i32, i32) {
    %c0_i32 = arith.constant 0 : i32
    %c0_i32_0 = arith.constant 0 : i32
    %c0_i32_1 = arith.constant 0 : i32
    return %c0_i32, %c0_i32_0 : i32, i32
  }
  func.func @transform_12(%arg0: i32, %arg1: i32) -> (i32, i32) {
    %c0_i32 = arith.constant 0 : i32
    %c0_i32_0 = arith.constant 0 : i32
    %c0_i32_1 = arith.constant 0 : i32
    return %c0_i32, %c0_i32_0 : i32, i32
  }
  func.func @transform_13(%arg0: i32, %arg1: i32) -> (i32, i32, i32) {
    %c0_i32 = arith.constant 0 : i32
    %c0_i32_0 = arith.constant 0 : i32
    return %arg0, %c0_i32, %arg1 : i32, i32, i32
  }
}

</mosaic_0001>

<llo_original>
// kernel: sbi_network_forward.2
$region0: #{sbi_network_forward.2}
  #allocation0 [shape = 'u32[]', space=smem, size = 0x4, offset = 0x4, fixed_abs, tag = 'smem constant byte address 0x4 - core index']
  #allocation1 [shape = 'u32[144,128]{1,0:T(1,128)}', space=vmem, size = 0x12000, scoped, tag = 'internal scratch']
  %s0 = inlined_call_operand.vmem [shape: f32[4,16], index: 0, kind: input, shape index: {}]
  %s1 = inlined_call_operand.vmem [shape: f32[16,64], index: 1, kind: input, shape index: {}]
  %s2 = inlined_call_operand.vmem [shape: f32[1,64], index: 2, kind: input, shape index: {}]
  %s3 = inlined_call_operand.vmem [shape: f32[64,64], index: 3, kind: input, shape index: {}]
  %s4 = inlined_call_operand.vmem [shape: f32[1,64], index: 4, kind: input, shape index: {}]
  %s5 = inlined_call_operand.vmem [shape: f32[64,32], index: 5, kind: input, shape index: {}]
  %s6 = inlined_call_operand.vmem [shape: f32[1,32], index: 6, kind: input, shape index: {}]
  %s7 = inlined_call_operand.vmem [shape: f32[32,128], index: 7, kind: input, shape index: {}]
  %s8 = inlined_call_operand.vmem [shape: f32[1,128], index: 8, kind: input, shape index: {}]
  %s9 = inlined_call_operand.vmem [shape: f32[4,128], index: 9, kind: output, shape index: {}]
  %s10 = sld [smem:[#allocation0]]
  $region46: #{sbi_network_forward.2} parent=0
    _
  %s12 = ssub.s32 1, %s10
  %s13 = scalar_select 0, %s12, %s10
  // Predicated region
  $region2: #{sbi_network_forward.2} parent=0 // pred_check
    _
  $region3: #{sbi_network_forward.2} parent=0 // pred_check_branch
    %15 = sbr.rel (0) target = $region5
  $region4: #{sbi_network_forward.2} parent=0 // pred_region
    _
  $region5: #{sbi_network_forward.2} parent=0 // pred_fallthru
    _
  // Predicated region
  $region6: #{sbi_network_forward.2} parent=0 // pred_check
    _
  $region7: #{sbi_network_forward.2} parent=0 // pred_check_branch
    %17 = sbr.rel (0) target = $region9
  $region8: #{sbi_network_forward.2} parent=0 // pred_region
    _
  $region9: #{sbi_network_forward.2} parent=0 // pred_fallthru
    _
  // Predicated region
  $region10: #{sbi_network_forward.2} parent=0 // pred_check
    _
  $region11: #{sbi_network_forward.2} parent=0 // pred_check_branch
    %19 = sbr.rel (0) target = $region13
  $region12: #{sbi_network_forward.2} parent=0 // pred_region
    _
  $region13: #{sbi_network_forward.2} parent=0 // pred_fallthru
    _
  // Predicated region
  $region14: #{sbi_network_forward.2} parent=0 // pred_check
    _
  $region15: #{sbi_network_forward.2} parent=0 // pred_check_branch
    %21 = sbr.rel (0) target = $region17
  $region16: #{sbi_network_forward.2} parent=0 // pred_region
    _
  $region17: #{sbi_network_forward.2} parent=0 // pred_fallthru
    _
  // Predicated region
  $region18: #{sbi_network_forward.2} parent=0 // pred_check
    _
  $region19: #{sbi_network_forward.2} parent=0 // pred_check_branch
    %23 = sbr.rel (0) target = $region21
  $region20: #{sbi_network_forward.2} parent=0 // pred_region
    _
  $region21: #{sbi_network_forward.2} parent=0 // pred_fallthru
    _
  // Predicated region
  $region22: #{sbi_network_forward.2} parent=0 // pred_check
    _
  $region23: #{sbi_network_forward.2} parent=0 // pred_check_branch
    %25 = sbr.rel (0) target = $region25
  $region24: #{sbi_network_forward.2} parent=0 // pred_region
    _
  $region25: #{sbi_network_forward.2} parent=0 // pred_fallthru
    _
  // Predicated region
  $region26: #{sbi_network_forward.2} parent=0 // pred_check
    _
  $region27: #{sbi_network_forward.2} parent=0 // pred_check_branch
    %27 = sbr.rel (0) target = $region29
  $region28: #{sbi_network_forward.2} parent=0 // pred_region
    _
  $region29: #{sbi_network_forward.2} parent=0 // pred_fallthru
    _
  // Predicated region
  $region30: #{sbi_network_forward.2} parent=0 // pred_check
    _
  $region31: #{sbi_network_forward.2} parent=0 // pred_check_branch
    %29 = sbr.rel (0) target = $region33
  $region32: #{sbi_network_forward.2} parent=0 // pred_region
    _
  $region33: #{sbi_network_forward.2} parent=0 // pred_fallthru
    _
  // Predicated region
  $region34: #{sbi_network_forward.2} parent=0 // pred_check
    _
  $region35: #{sbi_network_forward.2} parent=0 // pred_check_branch
    %31 = sbr.rel (0) target = $region37
  $region36: #{sbi_network_forward.2} parent=0 // pred_region
    _
  $region37: #{sbi_network_forward.2} parent=0 // pred_fallthru
    _
  %v32 = vld [vmem:[%s0] sm:$0xf]
  %v33 = vld [vmem:[%s1] sm:$0xff]
  %v34 = vld [vmem:[%s1 + $0x8] sm:$0xff]
  %v35 = vld [vmem:[%s2] sm:$0x1]
  %v37 = vlaneseq
  %v38 = vshrl.u32 %v37, 7
  %v39 = vsub.s32 0, %v38
  %v40 = vrot.slane %v35, %v39
  %vm42 = vcmask 130048
  %v44 = vsel %vm42, %v32, 0
  %46 = vmatprep.subr.mxu0 0.0
  %47 = vmatpush1.msra.mxu0 %v33
  %48 = vmatprep.subr.mxu0 0.0
  %49 = vmatpush1.msra.mxu0 %v34
  %50 = vmatprep.subr.mxu0 0.0
  %51 = vmatpush1.msra.mxu0 0.0
  %52 = vmatprep.subr.mxu0 0.0
  %53 = vmatpush1.msra.mxu0 0.0
  %54 = vmatprep.subr.mxu0 0.0
  %55 = vmatpush1.msra.mxu0 0.0
  %56 = vmatprep.subr.mxu0 0.0
  %57 = vmatpush1.msra.mxu0 0.0
  %58 = vmatprep.subr.mxu0 0.0
  %59 = vmatpush1.msra.mxu0 0.0
  %60 = vmatprep.subr.mxu0 0.0
  %61 = vmatpush1.msra.mxu0 0.0
  %62 = vmatprep.subr.mxu0 0.0
  %63 = vmatpush1.msra.mxu0 0.0
  %64 = vmatprep.subr.mxu0 0.0
  %65 = vmatpush1.msra.mxu0 0.0
  %66 = vmatprep.subr.mxu0 0.0
  %67 = vmatpush1.msra.mxu0 0.0
  %68 = vmatprep.subr.mxu0 0.0
  %69 = vmatpush1.msra.mxu0 0.0
  %70 = vmatprep.subr.mxu0 0.0
  %71 = vmatpush1.msra.mxu0 0.0
  %72 = vmatprep.subr.mxu0 0.0
  %73 = vmatpush1.msra.mxu0 0.0
  %74 = vmatprep.subr.mxu0 0.0
  %75 = vmatpush1.msra.mxu0 0.0
  %76 = vmatprep.subr.mxu0 0.0
  %77 = vmatpush1.msra.mxu0 0.0
  %78 = vmatprep.subr.mxu0 0.0
  %79 = vmatpush1.msra.mxu0 0.0
  %80 = vmatprep.subr.mxu0 0.0
  %81 = vmatpush1.msra.mxu0 0.0
  %82 = vmatprep.subr.mxu0 0.0
  %83 = vmatpush1.msra.mxu0 0.0
  %84 = vmatprep.subr.mxu0 0.0
  %85 = vmatpush1.msra.mxu0 0.0
  %86 = vmatprep.subr.mxu0 0.0
  %87 = vmatpush1.msra.mxu0 0.0
  %88 = vmatprep.subr.mxu0 0.0
  %89 = vmatpush1.msra.mxu0 0.0
  %90 = vmatprep.subr.mxu0 0.0
  %91 = vmatpush1.msra.mxu0 0.0
  %92 = vmatprep.subr.mxu0 0.0
  %93 = vmatpush1.msra.mxu0 0.0
  %94 = vmatprep.subr.mxu0 0.0
  %95 = vmatpush1.msra.mxu0 0.0
  %96 = vmatprep.subr.mxu0 0.0
  %97 = vmatpush1.msra.mxu0 0.0
  %98 = vmatprep.subr.mxu0 0.0
  %99 = vmatpush1.msra.mxu0 0.0
  %100 = vmatprep.subr.mxu0 0.0
  %101 = vmatpush1.msra.mxu0 0.0
  %102 = vmatprep.subr.mxu0 0.0
  %103 = vmatpush1.msra.mxu0 0.0
  %104 = vmatprep.subr.mxu0 0.0
  %105 = vmatpush1.msra.mxu0 0.0
  %106 = vmatprep.subr.mxu0 0.0
  %107 = vmatpush1.msra.mxu0 0.0
  %108 = vmatprep.subr.mxu0 0.0
  %109 = vmatpush1.msra.mxu0 0.0
  %110 = vmatprep.mubr.f32.mxu0 0.0
  %111 = vmatmul.mubr.f32.gmra.mrb[0].mxu0 %v44
  %v112 = vpop.f32.mrb[0].mxu0
  %v113 = vadd.f32 %v40, %v112
  %v114 = vpop.f32.mrb[0].mxu0
  %115 = vdwg.mxu0
  %v116 = vmax.f32 %v113, 0.0
  %v117 = vld [vmem:[%s3] sm:$0xff]
  %v118 = vld [vmem:[%s3 + $0x8] sm:$0xff]
  %v119 = vld [vmem:[%s3 + $0x10] sm:$0xff]
  %v120 = vld [vmem:[%s3 + $0x18] sm:$0xff]
  %v121 = vld [vmem:[%s3 + $0x20] sm:$0xff]
  %v122 = vld [vmem:[%s3 + $0x28] sm:$0xff]
  %v123 = vld [vmem:[%s3 + $0x30] sm:$0xff]
  %v124 = vld [vmem:[%s3 + $0x38] sm:$0xff]
  %v125 = vld [vmem:[%s4] sm:$0x1]
  %v127 = vlaneseq
  %v128 = vshrl.u32 %v127, 7
  %v129 = vsub.s32 0, %v128
  %v130 = vrot.slane %v125, %v129
  %vm132 = vcmask 523264
  %v134 = vsel %vm132, %v116, 0
  %136 = vmatprep.subr.mxu0 0.0
  %137 = vmatpush1.msra.mxu0 %v117
  %138 = vmatprep.subr.mxu0 0.0
  %139 = vmatpush1.msra.mxu0 %v118
  %140 = vmatprep.subr.mxu0 0.0
  %141 = vmatpush1.msra.mxu0 %v119
  %142 = vmatprep.subr.mxu0 0.0
  %143 = vmatpush1.msra.mxu0 %v120
  %144 = vmatprep.subr.mxu0 0.0
  %145 = vmatpush1.msra.mxu0 %v121
  %146 = vmatprep.subr.mxu0 0.0
  %147 = vmatpush1.msra.mxu0 %v122
  %148 = vmatprep.subr.mxu0 0.0
  %149 = vmatpush1.msra.mxu0 %v123
  %150 = vmatprep.subr.mxu0 0.0
  %151 = vmatpush1.msra.mxu0 %v124
  %152 = vmatprep.subr.mxu0 0.0
  %153 = vmatpush1.msra.mxu0 0.0
  %154 = vmatprep.subr.mxu0 0.0
  %155 = vmatpush1.msra.mxu0 0.0
  %156 = vmatprep.subr.mxu0 0.0
  %157 = vmatpush1.msra.mxu0 0.0
  %158 = vmatprep.subr.mxu0 0.0
  %159 = vmatpush1.msra.mxu0 0.0
  %160 = vmatprep.subr.mxu0 0.0
  %161 = vmatpush1.msra.mxu0 0.0
  %162 = vmatprep.subr.mxu0 0.0
  %163 = vmatpush1.msra.mxu0 0.0
  %164 = vmatprep.subr.mxu0 0.0
  %165 = vmatpush1.msra.mxu0 0.0
  %166 = vmatprep.subr.mxu0 0.0
  %167 = vmatpush1.msra.mxu0 0.0
  %168 = vmatprep.subr.mxu0 0.0
  %169 = vmatpush1.msra.mxu0 0.0
  %170 = vmatprep.subr.mxu0 0.0
  %171 = vmatpush1.msra.mxu0 0.0
  %172 = vmatprep.subr.mxu0 0.0
  %173 = vmatpush1.msra.mxu0 0.0
  %174 = vmatprep.subr.mxu0 0.0
  %175 = vmatpush1.msra.mxu0 0.0
  %176 = vmatprep.subr.mxu0 0.0
  %177 = vmatpush1.msra.mxu0 0.0
  %178 = vmatprep.subr.mxu0 0.0
  %179 = vmatpush1.msra.mxu0 0.0
  %180 = vmatprep.subr.mxu0 0.0
  %181 = vmatpush1.msra.mxu0 0.0
  %182 = vmatprep.subr.mxu0 0.0
  %183 = vmatpush1.msra.mxu0 0.0
  %184 = vmatprep.subr.mxu0 0.0
  %185 = vmatpush1.msra.mxu0 0.0
  %186 = vmatprep.subr.mxu0 0.0
  %187 = vmatpush1.msra.mxu0 0.0
  %188 = vmatprep.subr.mxu0 0.0
  %189 = vmatpush1.msra.mxu0 0.0
  %190 = vmatprep.subr.mxu0 0.0
  %191 = vmatpush1.msra.mxu0 0.0
  %192 = vmatprep.subr.mxu0 0.0
  %193 = vmatpush1.msra.mxu0 0.0
  %194 = vmatprep.subr.mxu0 0.0
  %195 = vmatpush1.msra.mxu0 0.0
  %196 = vmatprep.subr.mxu0 0.0
  %197 = vmatpush1.msra.mxu0 0.0
  %198 = vmatprep.subr.mxu0 0.0
  %199 = vmatpush1.msra.mxu0 0.0
  %200 = vmatprep.mubr.f32.mxu0 0.0
  %201 = vmatmul.mubr.f32.gmra.mrb[0].mxu0 %v134
  %v202 = vpop.f32.mrb[0].mxu0
  %v203 = vadd.f32 %v130, %v202
  %v204 = vpop.f32.mrb[0].mxu0
  %205 = vdwg.mxu0
  %v206 = vmax.f32 %v203, 0.0
  %v207 = vld [vmem:[%s5] sm:$0xff]
  %v208 = vld [vmem:[%s5 + $0x8] sm:$0xff]
  %v209 = vld [vmem:[%s5 + $0x10] sm:$0xff]
  %v210 = vld [vmem:[%s5 + $0x18] sm:$0xff]
  %v211 = vld [vmem:[%s5 + $0x20] sm:$0xff]
  %v212 = vld [vmem:[%s5 + $0x28] sm:$0xff]
  %v213 = vld [vmem:[%s5 + $0x30] sm:$0xff]
  %v214 = vld [vmem:[%s5 + $0x38] sm:$0xff]
  %v215 = vld [vmem:[%s6] sm:$0x1]
  %v217 = vlaneseq
  %v218 = vshrl.u32 %v217, 7
  %v219 = vsub.s32 0, %v218
  %v220 = vrot.slane %v215, %v219
  %v223 = vsel %vm132, %v206, 0
  %225 = vmatprep.subr.mxu0 0.0
  %226 = vmatpush1.msra.mxu0 %v207
  %227 = vmatprep.subr.mxu0 0.0
  %228 = vmatpush1.msra.mxu0 %v208
  %229 = vmatprep.subr.mxu0 0.0
  %230 = vmatpush1.msra.mxu0 %v209
  %231 = vmatprep.subr.mxu0 0.0
  %232 = vmatpush1.msra.mxu0 %v210
  %233 = vmatprep.subr.mxu0 0.0
  %234 = vmatpush1.msra.mxu0 %v211
  %235 = vmatprep.subr.mxu0 0.0
  %236 = vmatpush1.msra.mxu0 %v212
  %237 = vmatprep.subr.mxu0 0.0
  %238 = vmatpush1.msra.mxu0 %v213
  %239 = vmatprep.subr.mxu0 0.0
  %240 = vmatpush1.msra.mxu0 %v214
  %241 = vmatprep.subr.mxu0 0.0
  %242 = vmatpush1.msra.mxu0 0.0
  %243 = vmatprep.subr.mxu0 0.0
  %244 = vmatpush1.msra.mxu0 0.0
  %245 = vmatprep.subr.mxu0 0.0
  %246 = vmatpush1.msra.mxu0 0.0
  %247 = vmatprep.subr.mxu0 0.0
  %248 = vmatpush1.msra.mxu0 0.0
  %249 = vmatprep.subr.mxu0 0.0
  %250 = vmatpush1.msra.mxu0 0.0
  %251 = vmatprep.subr.mxu0 0.0
  %252 = vmatpush1.msra.mxu0 0.0
  %253 = vmatprep.subr.mxu0 0.0
  %254 = vmatpush1.msra.mxu0 0.0
  %255 = vmatprep.subr.mxu0 0.0
  %256 = vmatpush1.msra.mxu0 0.0
  %257 = vmatprep.subr.mxu0 0.0
  %258 = vmatpush1.msra.mxu0 0.0
  %259 = vmatprep.subr.mxu0 0.0
  %260 = vmatpush1.msra.mxu0 0.0
  %261 = vmatprep.subr.mxu0 0.0
  %262 = vmatpush1.msra.mxu0 0.0
  %263 = vmatprep.subr.mxu0 0.0
  %264 = vmatpush1.msra.mxu0 0.0
  %265 = vmatprep.subr.mxu0 0.0
  %266 = vmatpush1.msra.mxu0 0.0
  %267 = vmatprep.subr.mxu0 0.0
  %268 = vmatpush1.msra.mxu0 0.0
  %269 = vmatprep.subr.mxu0 0.0
  %270 = vmatpush1.msra.mxu0 0.0
  %271 = vmatprep.subr.mxu0 0.0
  %272 = vmatpush1.msra.mxu0 0.0
  %273 = vmatprep.subr.mxu0 0.0
  %274 = vmatpush1.msra.mxu0 0.0
  %275 = vmatprep.subr.mxu0 0.0
  %276 = vmatpush1.msra.mxu0 0.0
  %277 = vmatprep.subr.mxu0 0.0
  %278 = vmatpush1.msra.mxu0 0.0
  %279 = vmatprep.subr.mxu0 0.0
  %280 = vmatpush1.msra.mxu0 0.0
  %281 = vmatprep.subr.mxu0 0.0
  %282 = vmatpush1.msra.mxu0 0.0
  %283 = vmatprep.subr.mxu0 0.0
  %284 = vmatpush1.msra.mxu0 0.0
  %285 = vmatprep.subr.mxu0 0.0
  %286 = vmatpush1.msra.mxu0 0.0
  %287 = vmatprep.subr.mxu0 0.0
  %288 = vmatpush1.msra.mxu0 0.0
  %289 = vmatprep.mubr.f32.mxu0 0.0
  %290 = vmatmul.mubr.f32.gmra.mrb[0].mxu0 %v223
  %v291 = vpop.f32.mrb[0].mxu0
  %v292 = vadd.f32 %v220, %v291
  %v293 = vpop.f32.mrb[0].mxu0
  %294 = vdwg.mxu0
  %v295 = vld [vmem:[%s7] sm:$0xff]
  %v296 = vld [vmem:[%s7 + $0x8] sm:$0xff]
  %v297 = vld [vmem:[%s7 + $0x10] sm:$0xff]
  %v298 = vld [vmem:[%s7 + $0x18] sm:$0xff]
  %v299 = vld [vmem:[%s8] sm:$0x1]
  %v301 = vlaneseq
  %v302 = vshrl.u32 %v301, 7
  %v303 = vsub.s32 0, %v302
  %v304 = vrot.slane %v299, %v303
  %vm306 = vcmask 261120
  %v308 = vsel %vm306, %v292, 0
  %310 = vmatprep.subr.mxu0 0.0
  %311 = vmatpush1.msra.mxu0 %v295
  %312 = vmatprep.subr.mxu0 0.0
  %313 = vmatpush1.msra.mxu0 %v296
  %314 = vmatprep.subr.mxu0 0.0
  %315 = vmatpush1.msra.mxu0 %v297
  %316 = vmatprep.subr.mxu0 0.0
  %317 = vmatpush1.msra.mxu0 %v298
  %318 = vmatprep.subr.mxu0 0.0
  %319 = vmatpush1.msra.mxu0 0.0
  %320 = vmatprep.subr.mxu0 0.0
  %321 = vmatpush1.msra.mxu0 0.0
  %322 = vmatprep.subr.mxu0 0.0
  %323 = vmatpush1.msra.mxu0 0.0
  %324 = vmatprep.subr.mxu0 0.0
  %325 = vmatpush1.msra.mxu0 0.0
  %326 = vmatprep.subr.mxu0 0.0
  %327 = vmatpush1.msra.mxu0 0.0
  %328 = vmatprep.subr.mxu0 0.0
  %329 = vmatpush1.msra.mxu0 0.0
  %330 = vmatprep.subr.mxu0 0.0
  %331 = vmatpush1.msra.mxu0 0.0
  %332 = vmatprep.subr.mxu0 0.0
  %333 = vmatpush1.msra.mxu0 0.0
  %334 = vmatprep.subr.mxu0 0.0
  %335 = vmatpush1.msra.mxu0 0.0
  %336 = vmatprep.subr.mxu0 0.0
  %337 = vmatpush1.msra.mxu0 0.0
  %338 = vmatprep.subr.mxu0 0.0
  %339 = vmatpush1.msra.mxu0 0.0
  %340 = vmatprep.subr.mxu0 0.0
  %341 = vmatpush1.msra.mxu0 0.0
  %342 = vmatprep.subr.mxu0 0.0
  %343 = vmatpush1.msra.mxu0 0.0
  %344 = vmatprep.subr.mxu0 0.0
  %345 = vmatpush1.msra.mxu0 0.0
  %346 = vmatprep.subr.mxu0 0.0
  %347 = vmatpush1.msra.mxu0 0.0
  %348 = vmatprep.subr.mxu0 0.0
  %349 = vmatpush1.msra.mxu0 0.0
  %350 = vmatprep.subr.mxu0 0.0
  %351 = vmatpush1.msra.mxu0 0.0
  %352 = vmatprep.subr.mxu0 0.0
  %353 = vmatpush1.msra.mxu0 0.0
  %354 = vmatprep.subr.mxu0 0.0
  %355 = vmatpush1.msra.mxu0 0.0
  %356 = vmatprep.subr.mxu0 0.0
  %357 = vmatpush1.msra.mxu0 0.0
  %358 = vmatprep.subr.mxu0 0.0
  %359 = vmatpush1.msra.mxu0 0.0
  %360 = vmatprep.subr.mxu0 0.0
  %361 = vmatpush1.msra.mxu0 0.0
  %362 = vmatprep.subr.mxu0 0.0
  %363 = vmatpush1.msra.mxu0 0.0
  %364 = vmatprep.subr.mxu0 0.0
  %365 = vmatpush1.msra.mxu0 0.0
  %366 = vmatprep.subr.mxu0 0.0
  %367 = vmatpush1.msra.mxu0 0.0
  %368 = vmatprep.subr.mxu0 0.0
  %369 = vmatpush1.msra.mxu0 0.0
  %370 = vmatprep.subr.mxu0 0.0
  %371 = vmatpush1.msra.mxu0 0.0
  %372 = vmatprep.subr.mxu0 0.0
  %373 = vmatpush1.msra.mxu0 0.0
  %374 = vmatprep.mubr.f32.mxu0 0.0
  %375 = vmatmul.mubr.f32.gmra.mrb[0].mxu0 %v308
  %v376 = vpop.f32.mrb[0].mxu0
  %v377 = vadd.f32 %v304, %v376
  %v378 = vpop.f32.mrb[0].mxu0
  %379 = vdwg.mxu0
  %380 = vst [vmem:[%s9] sm:$0xf] %v377
  // Predicated region
  $region38: #{sbi_network_forward.2} parent=0 // pred_check
    _
  $region39: #{sbi_network_forward.2} parent=0 // pred_check_branch
    %382 = sbr.rel (0) target = $region41
  $region40: #{sbi_network_forward.2} parent=0 // pred_region
    _
  $region41: #{sbi_network_forward.2} parent=0 // pred_fallthru
    _
  // Predicated region
  $region42: #{sbi_network_forward.2} parent=0 // pred_check
    _
  $region43: #{sbi_network_forward.2} parent=0 // pred_check_branch
    %384 = sbr.rel (0) target = $region45
  $region44: #{sbi_network_forward.2} parent=0 // pred_region
    _
  $region45: #{sbi_network_forward.2} parent=0 // pred_fallthru
    _

// kernel: sbi_network_forward.3
$region0: #{sbi_network_forward.3}
  #allocation0 [shape = 'u32[]', space=smem, size = 0x4, offset = 0x4, fixed_abs, tag = 'smem constant byte address 0x4 - core index']
  #allocation1 [shape = 'u32[144,128]{1,0:T(1,128)}', space=vmem, size = 0x12000, scoped, tag = 'internal scratch']
  #allocation2 [shape = 'f32[1,1]{1,0:T(1,128)S(1)}', space=vmem, size = 0x200, scoped, tag = 'scoped memory for sbi_network_forward.3']
  %s0 = inlined_call_operand.vmem [shape: f32[4,8,24], index: 0, kind: input, shape index: {}]
  %s1 = inlined_call_operand.vmem [shape: f32[4,1,128], index: 1, kind: input, shape index: {}]
  %s2 = inlined_call_operand.vmem [shape: f32[24,64], index: 2, kind: input, shape index: {}]
  %s3 = inlined_call_operand.vmem [shape: f32[1,64], index: 3, kind: input, shape index: {}]
  %s4 = inlined_call_operand.vmem [shape: f32[64,64], index: 4, kind: input, shape index: {}]
  %s5 = inlined_call_operand.vmem [shape: f32[1,64], index: 5, kind: input, shape index: {}]
  %s6 = inlined_call_operand.vmem [shape: f32[64,32], index: 6, kind: input, shape index: {}]
  %s7 = inlined_call_operand.vmem [shape: f32[1,32], index: 7, kind: input, shape index: {}]
  %s8 = inlined_call_operand.vmem [shape: f32[32,128], index: 8, kind: input, shape index: {}]
  %s9 = inlined_call_operand.vmem [shape: f32[128,64], index: 9, kind: input, shape index: {}]
  %s10 = inlined_call_operand.vmem [shape: f32[1,64], index: 10, kind: input, shape index: {}]
  %s11 = inlined_call_operand.vmem [shape: f32[1,64], index: 11, kind: input, shape index: {}]
  %s12 = inlined_call_operand.<no memory space> [shape: f32[1,1], index: 12, kind: input, shape index: {}]
  %s13 = inlined_call_operand.hbm [shape: f32[4,1,8], index: 13, kind: output, shape index: {}]
  %s14 = sld [smem:[#allocation0]]
  $region85: #{sbi_network_forward.3} parent=0
    _
  %s16 = ssub.s32 1, %s14
  %s17 = scalar_select 0, %s16, %s14
  %v18 = vstv %s12
  %19 = vst [vmem:[#allocation2] sm:$0x1] %v18
  $region1: #{sbi_network_forward.3} parent=0
    #allocation3 [shape = 'u8[1024]{0}', space=vmem, size = 0x400, scoped, tag = 'output window, operand 0']
    #allocation4 [shape = 's32[2]{0}', space=sflag, size = 0x8, scoped, tag = 'scoped memory for sbi_network_forward.3']
    %20 = vsyncpa [#allocation4], 0
    %s21 = scalar_lea.sflag [#allocation4], 1
    %22 = vsyncpa %s21, 0
    loop: start=0, step=1, limit=6
    $region2: #{sbi_network_forward.3} parent=1 // loop_pre_header
      _
    $region3: #{sbi_network_forward.3} parent=1 // loop_header
      %s24 = sphi 0, %s28
      %p25 = scmp.ge.s32.totalorder %s24, 6
      %s31 = sphi 0, %s43
      %s32 = sphi 0, %s39
      %s33 = sphi 0, %s31
      %s34 = sphi 0, %s32
      %s35 = sphi 0, %s33
      %s36 = sphi 0, %s34
      %s48 = sphi 0, %s50
      %s51 = sphi 0, %s48
      %s52 = sphi 0, %s51
      %s68 = sphi 0, %s52
      %s74 = sphi 0, %s76
      %s77 = sphi 0, %s74
      %s78 = sphi 0, %s77
      %s94 = sphi 0, %s78
      %s98 = sphi 0, %s98
      %s100 = sphi 0, %s98
      %s101 = sphi 0, %s100
      %s115 = sphi 0, %s101
      %s119 = sphi 0, %s119
      %s121 = sphi 0, %s119
      %s122 = sphi 0, %s121
      %s136 = sphi 0, %s122
      %s140 = sphi 0, %s140
      %s142 = sphi 0, %s140
      %s143 = sphi 0, %s142
      %s157 = sphi 0, %s143
      %s161 = sphi 0, %s161
      %s163 = sphi 0, %s161
      %s164 = sphi 0, %s163
      %s178 = sphi 0, %s164
      %s182 = sphi 0, %s182
      %s184 = sphi 0, %s182
      %s185 = sphi 0, %s184
      %s199 = sphi 0, %s185
      %s203 = sphi 0, %s203
      %s205 = sphi 0, %s203
      %s206 = sphi 0, %s205
      %s220 = sphi 0, %s206
      %s224 = sphi 0, %s224
      %s226 = sphi 0, %s224
      %s227 = sphi 0, %s226
      %s241 = sphi 0, %s227
      %s245 = sphi 0, %s245
      %s247 = sphi 0, %s245
      %s248 = sphi 0, %s247
      %s262 = sphi 0, %s248
      %s266 = sphi 0, %s266
      %s268 = sphi 0, %s266
      %s269 = sphi 0, %s268
      %s283 = sphi 0, %s269
      %s287 = sphi 0, %s287
      %s289 = sphi 0, %s287
      %s290 = sphi 0, %s289
      %s304 = sphi 0, %s290
      %s308 = sphi 0, %s308
      %s310 = sphi 0, %s308
      %s311 = sphi 0, %s310
      %s325 = sphi 0, %s311
      %s333 = sphi 0, %s335
      %s336 = sphi 0, %s333
      %s337 = sphi 0, %s336
      %s353 = sphi 0, %s337
    $region4: #{sbi_network_forward.3} parent=1 // loop_header_branch
      %27 = sbr.rel (%p25) target = $region8
    $region5: #{sbi_network_forward.3} parent=1 // loop_body
      %s29 = ssub.s32 %s24, 1
      %s30 = ssub.s32 %s24, 2
      %s37 = sadd.s32 1, %s32
      %p38 = scmp.ge.s32.totalorder %s37, 1
      %s39 = scalar_select %p38, 0, %s37
      %s40 = sadd.s32 1, %s31
      %s41 = scalar_select %p38, %s40, %s31
      %p42 = scmp.ge.s32.totalorder %s41, 4
      %s43 = scalar_select %p42, 0, %s41
      %s44 = ssub.s32 %s31, %s43
      %s45 = ssub.s32 %s32, %s39
      %s46 = sor.u32 %s44, %s45
      %p47 = scmp.eq.s32.totalorder %s46, 0
      %s49 = sadd.s32 %s48, 1
      %s50 = scalar_select %p47, %s48, %s49
      %p53 = pneg %p47
      %p54 = scmp.eq.s32.totalorder %s24, 3
      %p55 = por %p53, %p54
      %p56 = scmp.ne.s32.totalorder %s48, %s51
      %p57 = scmp.eq.s32.totalorder %s24, 0
      %p58 = por %p56, %p57
      %p59 = scmp.ne.s32.totalorder %s48, %s51
      %p60 = scmp.eq.s32.totalorder %s29, 3
      %p61 = por %p59, %p60
      %p62 = scmp.ne.s32.totalorder %s51, %s52
      %p63 = scmp.eq.s32.totalorder %s29, 0
      %p64 = por %p62, %p63
      %p65 = scmp.ne.s32.totalorder %s51, %s52
      %p66 = scmp.eq.s32.totalorder %s30, 3
      %p67 = por %p65, %p66
      %p69 = scmp.ne.s32.totalorder %s52, %s68
      %p70 = scmp.eq.s32.totalorder %s30, 0
      %p71 = por %p69, %p70
      %s72 = ssub.s32 %s31, %s43
      %p73 = scmp.eq.s32.totalorder %s72, 0
      %s75 = sadd.s32 %s74, 1
      %s76 = scalar_select %p73, %s74, %s75
      %p79 = pneg %p73
      %p80 = scmp.eq.s32.totalorder %s24, 3
      %p81 = por %p79, %p80
      %p82 = scmp.ne.s32.totalorder %s74, %s77
      %p83 = scmp.eq.s32.totalorder %s24, 0
      %p84 = por %p82, %p83
      %p85 = scmp.ne.s32.totalorder %s74, %s77
      %p86 = scmp.eq.s32.totalorder %s29, 3
      %p87 = por %p85, %p86
      %p88 = scmp.ne.s32.totalorder %s77, %s78
      %p89 = scmp.eq.s32.totalorder %s29, 0
      %p90 = por %p88, %p89
      %p91 = scmp.ne.s32.totalorder %s77, %s78
      %p92 = scmp.eq.s32.totalorder %s30, 3
      %p93 = por %p91, %p92
      %p95 = scmp.ne.s32.totalorder %s78, %s94
      %p96 = scmp.eq.s32.totalorder %s30, 0
      %p97 = por %p95, %p96
      %s99 = sadd.s32 %s98, 1
      %p102 = scmp.eq.s32.totalorder %s24, 3
      %p103 = scmp.ne.s32.totalorder %s98, %s100
      %p104 = scmp.eq.s32.totalorder %s24, 0
      %p105 = por %p103, %p104
      %p106 = scmp.ne.s32.totalorder %s98, %s100
      %p107 = scmp.eq.s32.totalorder %s29, 3
      %p108 = por %p106, %p107
      %p109 = scmp.ne.s32.totalorder %s100, %s101
      %p110 = scmp.eq.s32.totalorder %s29, 0
      %p111 = por %p109, %p110
      %p112 = scmp.ne.s32.totalorder %s100, %s101
      %p113 = scmp.eq.s32.totalorder %s30, 3
      %p114 = por %p112, %p113
      %p116 = scmp.ne.s32.totalorder %s101, %s115
      %p117 = scmp.eq.s32.totalorder %s30, 0
      %p118 = por %p116, %p117
      %s120 = sadd.s32 %s119, 1
      %p123 = scmp.eq.s32.totalorder %s24, 3
      %p124 = scmp.ne.s32.totalorder %s119, %s121
      %p125 = scmp.eq.s32.totalorder %s24, 0
      %p126 = por %p124, %p125
      %p127 = scmp.ne.s32.totalorder %s119, %s121
      %p128 = scmp.eq.s32.totalorder %s29, 3
      %p129 = por %p127, %p128
      %p130 = scmp.ne.s32.totalorder %s121, %s122
      %p131 = scmp.eq.s32.totalorder %s29, 0
      %p132 = por %p130, %p131
      %p133 = scmp.ne.s32.totalorder %s121, %s122
      %p134 = scmp.eq.s32.totalorder %s30, 3
      %p135 = por %p133, %p134
      %p137 = scmp.ne.s32.totalorder %s122, %s136
      %p138 = scmp.eq.s32.totalorder %s30, 0
      %p139 = por %p137, %p138
      %s141 = sadd.s32 %s140, 1
      %p144 = scmp.eq.s32.totalorder %s24, 3
      %p145 = scmp.ne.s32.totalorder %s140, %s142
      %p146 = scmp.eq.s32.totalorder %s24, 0
      %p147 = por %p145, %p146
      %p148 = scmp.ne.s32.totalorder %s140, %s142
      %p149 = scmp.eq.s32.totalorder %s29, 3
      %p150 = por %p148, %p149
      %p151 = scmp.ne.s32.totalorder %s142, %s143
      %p152 = scmp.eq.s32.totalorder %s29, 0
      %p153 = por %p151, %p152
      %p154 = scmp.ne.s32.totalorder %s142, %s143
      %p155 = scmp.eq.s32.totalorder %s30, 3
      %p156 = por %p154, %p155
      %p158 = scmp.ne.s32.totalorder %s143, %s157
      %p159 = scmp.eq.s32.totalorder %s30, 0
      %p160 = por %p158, %p159
      %s162 = sadd.s32 %s161, 1
      %p165 = scmp.eq.s32.totalorder %s24, 3
      %p166 = scmp.ne.s32.totalorder %s161, %s163
      %p167 = scmp.eq.s32.totalorder %s24, 0
      %p168 = por %p166, %p167
      %p169 = scmp.ne.s32.totalorder %s161, %s163
      %p170 = scmp.eq.s32.totalorder %s29, 3
      %p171 = por %p169, %p170
      %p172 = scmp.ne.s32.totalorder %s163, %s164
      %p173 = scmp.eq.s32.totalorder %s29, 0
      %p174 = por %p172, %p173
      %p175 = scmp.ne.s32.totalorder %s163, %s164
      %p176 = scmp.eq.s32.totalorder %s30, 3
      %p177 = por %p175, %p176
      %p179 = scmp.ne.s32.totalorder %s164, %s178
      %p180 = scmp.eq.s32.totalorder %s30, 0
      %p181 = por %p179, %p180
      %s183 = sadd.s32 %s182, 1
      %p186 = scmp.eq.s32.totalorder %s24, 3
      %p187 = scmp.ne.s32.totalorder %s182, %s184
      %p188 = scmp.eq.s32.totalorder %s24, 0
      %p189 = por %p187, %p188
      %p190 = scmp.ne.s32.totalorder %s182, %s184
      %p191 = scmp.eq.s32.totalorder %s29, 3
      %p192 = por %p190, %p191
      %p193 = scmp.ne.s32.totalorder %s184, %s185
      %p194 = scmp.eq.s32.totalorder %s29, 0
      %p195 = por %p193, %p194
      %p196 = scmp.ne.s32.totalorder %s184, %s185
      %p197 = scmp.eq.s32.totalorder %s30, 3
      %p198 = por %p196, %p197
      %p200 = scmp.ne.s32.totalorder %s185, %s199
      %p201 = scmp.eq.s32.totalorder %s30, 0
      %p202 = por %p200, %p201
      %s204 = sadd.s32 %s203, 1
      %p207 = scmp.eq.s32.totalorder %s24, 3
      %p208 = scmp.ne.s32.totalorder %s203, %s205
      %p209 = scmp.eq.s32.totalorder %s24, 0
      %p210 = por %p208, %p209
      %p211 = scmp.ne.s32.totalorder %s203, %s205
      %p212 = scmp.eq.s32.totalorder %s29, 3
      %p213 = por %p211, %p212
      %p214 = scmp.ne.s32.totalorder %s205, %s206
      %p215 = scmp.eq.s32.totalorder %s29, 0
      %p216 = por %p214, %p215
      %p217 = scmp.ne.s32.totalorder %s205, %s206
      %p218 = scmp.eq.s32.totalorder %s30, 3
      %p219 = por %p217, %p218
      %p221 = scmp.ne.s32.totalorder %s206, %s220
      %p222 = scmp.eq.s32.totalorder %s30, 0
      %p223 = por %p221, %p222
      %s225 = sadd.s32 %s224, 1
      %p228 = scmp.eq.s32.totalorder %s24, 3
      %p229 = scmp.ne.s32.totalorder %s224, %s226
      %p230 = scmp.eq.s32.totalorder %s24, 0
      %p231 = por %p229, %p230
      %p232 = scmp.ne.s32.totalorder %s224, %s226
      %p233 = scmp.eq.s32.totalorder %s29, 3
      %p234 = por %p232, %p233
      %p235 = scmp.ne.s32.totalorder %s226, %s227
      %p236 = scmp.eq.s32.totalorder %s29, 0
      %p237 = por %p235, %p236
      %p238 = scmp.ne.s32.totalorder %s226, %s227
      %p239 = scmp.eq.s32.totalorder %s30, 3
      %p240 = por %p238, %p239
      %p242 = scmp.ne.s32.totalorder %s227, %s241
      %p243 = scmp.eq.s32.totalorder %s30, 0
      %p244 = por %p242, %p243
      %s246 = sadd.s32 %s245, 1
      %p249 = scmp.eq.s32.totalorder %s24, 3
      %p250 = scmp.ne.s32.totalorder %s245, %s247
      %p251 = scmp.eq.s32.totalorder %s24, 0
      %p252 = por %p250, %p251
      %p253 = scmp.ne.s32.totalorder %s245, %s247
      %p254 = scmp.eq.s32.totalorder %s29, 3
      %p255 = por %p253, %p254
      %p256 = scmp.ne.s32.totalorder %s247, %s248
      %p257 = scmp.eq.s32.totalorder %s29, 0
      %p258 = por %p256, %p257
      %p259 = scmp.ne.s32.totalorder %s247, %s248
      %p260 = scmp.eq.s32.totalorder %s30, 3
      %p261 = por %p259, %p260
      %p263 = scmp.ne.s32.totalorder %s248, %s262
      %p264 = scmp.eq.s32.totalorder %s30, 0
      %p265 = por %p263, %p264
      %s267 = sadd.s32 %s266, 1
      %p270 = scmp.eq.s32.totalorder %s24, 3
      %p271 = scmp.ne.s32.totalorder %s266, %s268
      %p272 = scmp.eq.s32.totalorder %s24, 0
      %p273 = por %p271, %p272
      %p274 = scmp.ne.s32.totalorder %s266, %s268
      %p275 = scmp.eq.s32.totalorder %s29, 3
      %p276 = por %p274, %p275
      %p277 = scmp.ne.s32.totalorder %s268, %s269
      %p278 = scmp.eq.s32.totalorder %s29, 0
      %p279 = por %p277, %p278
      %p280 = scmp.ne.s32.totalorder %s268, %s269
      %p281 = scmp.eq.s32.totalorder %s30, 3
      %p282 = por %p280, %p281
      %p284 = scmp.ne.s32.totalorder %s269, %s283
      %p285 = scmp.eq.s32.totalorder %s30, 0
      %p286 = por %p284, %p285
      %s288 = sadd.s32 %s287, 1
      %p291 = scmp.eq.s32.totalorder %s24, 3
      %p292 = scmp.ne.s32.totalorder %s287, %s289
      %p293 = scmp.eq.s32.totalorder %s24, 0
      %p294 = por %p292, %p293
      %p295 = scmp.ne.s32.totalorder %s287, %s289
      %p296 = scmp.eq.s32.totalorder %s29, 3
      %p297 = por %p295, %p296
      %p298 = scmp.ne.s32.totalorder %s289, %s290
      %p299 = scmp.eq.s32.totalorder %s29, 0
      %p300 = por %p298, %p299
      %p301 = scmp.ne.s32.totalorder %s289, %s290
      %p302 = scmp.eq.s32.totalorder %s30, 3
      %p303 = por %p301, %p302
      %p305 = scmp.ne.s32.totalorder %s290, %s304
      %p306 = scmp.eq.s32.totalorder %s30, 0
      %p307 = por %p305, %p306
      %s309 = sadd.s32 %s308, 1
      %p312 = scmp.eq.s32.totalorder %s24, 3
      %p313 = scmp.ne.s32.totalorder %s308, %s310
      %p314 = scmp.eq.s32.totalorder %s24, 0
      %p315 = por %p313, %p314
      %p316 = scmp.ne.s32.totalorder %s308, %s310
      %p317 = scmp.eq.s32.totalorder %s29, 3
      %p318 = por %p316, %p317
      %p319 = scmp.ne.s32.totalorder %s310, %s311
      %p320 = scmp.eq.s32.totalorder %s29, 0
      %p321 = por %p319, %p320
      %p322 = scmp.ne.s32.totalorder %s310, %s311
      %p323 = scmp.eq.s32.totalorder %s30, 3
      %p324 = por %p322, %p323
      %p326 = scmp.ne.s32.totalorder %s311, %s325
      %p327 = scmp.eq.s32.totalorder %s30, 0
      %p328 = por %p326, %p327
      %s329 = ssub.s32 %s31, %s43
      %s330 = ssub.s32 %s32, %s39
      %s331 = sor.u32 %s329, %s330
      %p332 = scmp.eq.s32.totalorder %s331, 0
      %s334 = sadd.s32 %s333, 1
      %s335 = scalar_select %p332, %s333, %s334
      %p338 = pneg %p332
      %p339 = scmp.eq.s32.totalorder %s24, 3
      %p340 = por %p338, %p339
      %p341 = scmp.ne.s32.totalorder %s333, %s336
      %p342 = scmp.eq.s32.totalorder %s24, 0
      %p343 = por %p341, %p342
      %p344 = scmp.ne.s32.totalorder %s333, %s336
      %p345 = scmp.eq.s32.totalorder %s29, 3
      %p346 = por %p344, %p345
      %p347 = scmp.ne.s32.totalorder %s336, %s337
      %p348 = scmp.eq.s32.totalorder %s29, 0
      %p349 = por %p347, %p348
      %p350 = scmp.ne.s32.totalorder %s336, %s337
      %p351 = scmp.eq.s32.totalorder %s30, 3
      %p352 = por %p350, %p351
      %p354 = scmp.ne.s32.totalorder %s337, %s353
      %p355 = scmp.eq.s32.totalorder %s30, 0
      %p356 = por %p354, %p355
      %p357 = scmp.le.s32.totalorder 1, %s24
      %p358 = scmp.lt.s32.totalorder %s24, 5
      %p359 = pnand %p357, %p358
      %p360 = pneg %p359
      // Predicated region
      $region9: #{sbi_network_forward.3} parent=5 // pred_check
        _
      $region10: #{sbi_network_forward.3} parent=5 // pred_check_branch
        %362 = sbr.rel (%p359) target = $region12
      $region11: #{sbi_network_forward.3} parent=5 // pred_region
        %s363 = ssub.s32 %s24, 1
        // Predicated region
        $region13: #{sbi_network_forward.3} parent=11 // pred_check
          %p364 = pneg %p111
        $region14: #{sbi_network_forward.3} parent=11 // pred_check_branch
          %366 = sbr.rel (%p364) target = $region16
        $region15: #{sbi_network_forward.3} parent=11 // pred_region
          _
        $region16: #{sbi_network_forward.3} parent=11 // pred_fallthru
          _
        // Predicated region
        $region17: #{sbi_network_forward.3} parent=11 // pred_check
          %p367 = pneg %p132
        $region18: #{sbi_network_forward.3} parent=11 // pred_check_branch
          %369 = sbr.rel (%p367) target = $region20
        $region19: #{sbi_network_forward.3} parent=11 // pred_region
          _
        $region20: #{sbi_network_forward.3} parent=11 // pred_fallthru
          _
        // Predicated region
        $region21: #{sbi_network_forward.3} parent=11 // pred_check
          %p370 = pneg %p153
        $region22: #{sbi_network_forward.3} parent=11 // pred_check_branch
          %372 = sbr.rel (%p370) target = $region24
        $region23: #{sbi_network_forward.3} parent=11 // pred_region
          _
        $region24: #{sbi_network_forward.3} parent=11 // pred_fallthru
          _
        // Predicated region
        $region25: #{sbi_network_forward.3} parent=11 // pred_check
          %p373 = pneg %p174
        $region26: #{sbi_network_forward.3} parent=11 // pred_check_branch
          %375 = sbr.rel (%p373) target = $region28
        $region27: #{sbi_network_forward.3} parent=11 // pred_region
          _
        $region28: #{sbi_network_forward.3} parent=11 // pred_fallthru
          _
        // Predicated region
        $region29: #{sbi_network_forward.3} parent=11 // pred_check
          %p376 = pneg %p195
        $region30: #{sbi_network_forward.3} parent=11 // pred_check_branch
          %378 = sbr.rel (%p376) target = $region32
        $region31: #{sbi_network_forward.3} parent=11 // pred_region
          _
        $region32: #{sbi_network_forward.3} parent=11 // pred_fallthru
          _
        // Predicated region
        $region33: #{sbi_network_forward.3} parent=11 // pred_check
          %p379 = pneg %p216
        $region34: #{sbi_network_forward.3} parent=11 // pred_check_branch
          %381 = sbr.rel (%p379) target = $region36
        $region35: #{sbi_network_forward.3} parent=11 // pred_region
          _
        $region36: #{sbi_network_forward.3} parent=11 // pred_fallthru
          _
        // Predicated region
        $region37: #{sbi_network_forward.3} parent=11 // pred_check
          %p382 = pneg %p237
        $region38: #{sbi_network_forward.3} parent=11 // pred_check_branch
          %384 = sbr.rel (%p382) target = $region40
        $region39: #{sbi_network_forward.3} parent=11 // pred_region
          _
        $region40: #{sbi_network_forward.3} parent=11 // pred_fallthru
          _
        // Predicated region
        $region41: #{sbi_network_forward.3} parent=11 // pred_check
          %p385 = pneg %p258
        $region42: #{sbi_network_forward.3} parent=11 // pred_check_branch
          %387 = sbr.rel (%p385) target = $region44
        $region43: #{sbi_network_forward.3} parent=11 // pred_region
          _
        $region44: #{sbi_network_forward.3} parent=11 // pred_fallthru
          _
        // Predicated region
        $region45: #{sbi_network_forward.3} parent=11 // pred_check
          %p388 = pneg %p279
        $region46: #{sbi_network_forward.3} parent=11 // pred_check_branch
          %390 = sbr.rel (%p388) target = $region48
        $region47: #{sbi_network_forward.3} parent=11 // pred_region
          _
        $region48: #{sbi_network_forward.3} parent=11 // pred_fallthru
          _
        // Predicated region
        $region49: #{sbi_network_forward.3} parent=11 // pred_check
          %p391 = pneg %p300
        $region50: #{sbi_network_forward.3} parent=11 // pred_check_branch
          %393 = sbr.rel (%p391) target = $region52
        $region51: #{sbi_network_forward.3} parent=11 // pred_region
          _
        $region52: #{sbi_network_forward.3} parent=11 // pred_fallthru
          _
        // Predicated region
        $region53: #{sbi_network_forward.3} parent=11 // pred_check
          %p394 = pneg %p321
        $region54: #{sbi_network_forward.3} parent=11 // pred_check_branch
          %396 = sbr.rel (%p394) target = $region56
        $region55: #{sbi_network_forward.3} parent=11 // pred_region
          _
        $region56: #{sbi_network_forward.3} parent=11 // pred_fallthru
          _
      $region12: #{sbi_network_forward.3} parent=5 // pred_fallthru
        _
      %p397 = scmp.lt.s32.totalorder %s24, 4
      // Predicated region
      $region57: #{sbi_network_forward.3} parent=5 // pred_check
        %p398 = pneg %p397
      $region58: #{sbi_network_forward.3} parent=5 // pred_check_branch
        %400 = sbr.rel (%p398) target = $region60
      $region59: #{sbi_network_forward.3} parent=5 // pred_region
        // Predicated region
        $region61: #{sbi_network_forward.3} parent=59 // pred_check
          %p401 = pneg %p58
        $region62: #{sbi_network_forward.3} parent=59 // pred_check_branch
          %403 = sbr.rel (%p401) target = $region64
        $region63: #{sbi_network_forward.3} parent=59 // pred_region
          %p404 = scmp.lt.s32.totalorder %s31, 3
          %s405 = scalar_select %p404, %s31, 3
          %p406 = scmp.lt.s32.totalorder %s32, 0
          %s407 = scalar_select %p406, %s32, 0
          %s408 = sadd.s32 %s407, %s405
          %s409 = smul.addr %s408, 8
          %s410 = scalar_lea.vmem %s0, %s409
        $region64: #{sbi_network_forward.3} parent=59 // pred_fallthru
          _
        // Predicated region
        $region65: #{sbi_network_forward.3} parent=59 // pred_check
          %p411 = pneg %p84
        $region66: #{sbi_network_forward.3} parent=59 // pred_check_branch
          %413 = sbr.rel (%p411) target = $region68
        $region67: #{sbi_network_forward.3} parent=59 // pred_region
          %p414 = scmp.lt.s32.totalorder %s31, 3
          %s415 = scalar_select %p414, %s31, 3
          %s416 = scalar_lea.vmem %s1, %s415
        $region68: #{sbi_network_forward.3} parent=59 // pred_fallthru
          _
      $region60: #{sbi_network_forward.3} parent=5 // pred_fallthru
        _
      %p417 = scmp.le.s32.totalorder 1, %s24
      %p418 = scmp.lt.s32.totalorder %s24, 5
      %p419 = pnand %p417, %p418
      %p420 = pneg %p419
      // Predicated region
      $region69: #{sbi_network_forward.3} parent=5 // pred_check
        _
      $region70: #{sbi_network_forward.3} parent=5 // pred_check_branch
        %422 = sbr.rel (%p419) target = $region72
      $region71: #{sbi_network_forward.3} parent=5 // pred_region
        %s423 = ssub.s32 %s24, 1
        %p424 = scmp.lt.s32.totalorder %s33, 3
        %s425 = scalar_select %p424, %s33, 3
        %p426 = scmp.lt.s32.totalorder %s34, 0
        %s427 = scalar_select %p426, %s34, 0
        %s428 = sadd.s32 %s427, %s425
        %s429 = smul.addr %s428, 8
        %s430 = scalar_lea.vmem %s0, %s429
        %p431 = pneg %p64
        %p432 = pneg %p61
        %p433 = scmp.lt.s32.totalorder %s33, 3
        %s434 = scalar_select %p433, %s33, 3
        %s435 = scalar_lea.vmem %s1, %s434
        %p436 = pneg %p90
        %p437 = pneg %p87
        %p438 = pneg %p111
        %p439 = pneg %p108
        %p440 = pneg %p132
        %p441 = pneg %p129
        %p442 = pneg %p153
        %p443 = pneg %p150
        %p444 = pneg %p174
        %p445 = pneg %p171
        %p446 = pneg %p195
        %p447 = pneg %p192
        %p448 = pneg %p216
        %p449 = pneg %p213
        %p450 = pneg %p237
        %p451 = pneg %p234
        %p452 = pneg %p258
        %p453 = pneg %p255
        %p454 = pneg %p279
        %p455 = pneg %p276
        %p456 = pneg %p300
        %p457 = pneg %p297
        %p458 = pneg %p321
        %p459 = pneg %p318
        %p460 = pneg %p349
        %p461 = pneg %p346
        %s462 = sand.u32 %s336, 1
        %s463 = scalar_lea.sflag [#allocation4], %s462
        %s464 = sand.u32 %s336, 1
        %s465 = scalar_lea.vmem [#allocation3], %s464
        %p466 = scmp.lt.s32.totalorder %s33, 3
        %s467 = scalar_select %p466, %s33, 3
        %p468 = scmp.lt.s32.totalorder %s34, 0
        %s469 = scalar_select %p468, %s34, 0
        %s470 = sadd.s32 %s469, %s467
        %s471 = smul.addr %s470, 8
        %s472 = scalar_lea.vmem %s0, %s471
        %p473 = scmp.lt.s32.totalorder %s33, 3
        %s474 = scalar_select %p473, %s33, 3
        %s475 = scalar_lea.vmem %s1, %s474
        %v476 = vld [vmem:[%s472] sm:$0xff]
        %v477 = vld [vmem:[%s2] sm:$0xff]
        %v478 = vld [vmem:[%s2 + $0x8] sm:$0xff]
        %v479 = vld [vmem:[%s2 + $0x10] sm:$0xff]
        %v480 = vld [vmem:[%s3] sm:$0x1]
        %v482 = vlaneseq
        %v483 = vshrl.u32 %v482, 7
        %v484 = vsub.s32 0, %v483
        %v485 = vrot.slane %v480, %v484
        %vm487 = vcmask 195584
        %v489 = vsel %vm487, %v476, 0
        %491 = vmatprep.subr.mxu0 0.0
        %492 = vmatpush1.msra.mxu0 %v477
        %493 = vmatprep.subr.mxu0 0.0
        %494 = vmatpush1.msra.mxu0 %v478
        %495 = vmatprep.subr.mxu0 0.0
        %496 = vmatpush1.msra.mxu0 %v479
        %497 = vmatprep.subr.mxu0 0.0
        %498 = vmatpush1.msra.mxu0 0.0
        %499 = vmatprep.subr.mxu0 0.0
        %500 = vmatpush1.msra.mxu0 0.0
        %501 = vmatprep.subr.mxu0 0.0
        %502 = vmatpush1.msra.mxu0 0.0
        %503 = vmatprep.subr.mxu0 0.0
        %504 = vmatpush1.msra.mxu0 0.0
        %505 = vmatprep.subr.mxu0 0.0
        %506 = vmatpush1.msra.mxu0 0.0
        %507 = vmatprep.subr.mxu0 0.0
        %508 = vmatpush1.msra.mxu0 0.0
        %509 = vmatprep.subr.mxu0 0.0
        %510 = vmatpush1.msra.mxu0 0.0
        %511 = vmatprep.subr.mxu0 0.0
        %512 = vmatpush1.msra.mxu0 0.0
        %513 = vmatprep.subr.mxu0 0.0
        %514 = vmatpush1.msra.mxu0 0.0
        %515 = vmatprep.subr.mxu0 0.0
        %516 = vmatpush1.msra.mxu0 0.0
        %517 = vmatprep.subr.mxu0 0.0
        %518 = vmatpush1.msra.mxu0 0.0
        %519 = vmatprep.subr.mxu0 0.0
        %520 = vmatpush1.msra.mxu0 0.0
        %521 = vmatprep.subr.mxu0 0.0
        %522 = vmatpush1.msra.mxu0 0.0
        %523 = vmatprep.subr.mxu0 0.0
        %524 = vmatpush1.msra.mxu0 0.0
        %525 = vmatprep.subr.mxu0 0.0
        %526 = vmatpush1.msra.mxu0 0.0
        %527 = vmatprep.subr.mxu0 0.0
        %528 = vmatpush1.msra.mxu0 0.0
        %529 = vmatprep.subr.mxu0 0.0
        %530 = vmatpush1.msra.mxu0 0.0
        %531 = vmatprep.subr.mxu0 0.0
        %532 = vmatpush1.msra.mxu0 0.0
        %533 = vmatprep.subr.mxu0 0.0
        %534 = vmatpush1.msra.mxu0 0.0
        %535 = vmatprep.subr.mxu0 0.0
        %536 = vmatpush1.msra.mxu0 0.0
        %537 = vmatprep.subr.mxu0 0.0
        %538 = vmatpush1.msra.mxu0 0.0
        %539 = vmatprep.subr.mxu0 0.0
        %540 = vmatpush1.msra.mxu0 0.0
        %541 = vmatprep.subr.mxu0 0.0
        %542 = vmatpush1.msra.mxu0 0.0
        %543 = vmatprep.subr.mxu0 0.0
        %544 = vmatpush1.msra.mxu0 0.0
        %545 = vmatprep.subr.mxu0 0.0
        %546 = vmatpush1.msra.mxu0 0.0
        %547 = vmatprep.subr.mxu0 0.0
        %548 = vmatpush1.msra.mxu0 0.0
        %549 = vmatprep.subr.mxu0 0.0
        %550 = vmatpush1.msra.mxu0 0.0
        %551 = vmatprep.subr.mxu0 0.0
        %552 = vmatpush1.msra.mxu0 0.0
        %553 = vmatprep.subr.mxu0 0.0
        %554 = vmatpush1.msra.mxu0 0.0
        %555 = vmatprep.mubr.f32.mxu0 0.0
        %556 = vmatmul.mubr.f32.gmra.mrb[0].mxu0 %v489
        %v557 = vpop.f32.mrb[0].mxu0
        %v558 = vadd.f32 %v485, %v557
        %v559 = vpop.f32.mrb[0].mxu0
        %560 = vdwg.mxu0
        %v561 = vmax.f32 %v558, 0.0
        %v562 = vld [vmem:[%s4] sm:$0xff]
        %v563 = vld [vmem:[%s4 + $0x8] sm:$0xff]
        %v564 = vld [vmem:[%s4 + $0x10] sm:$0xff]
        %v565 = vld [vmem:[%s4 + $0x18] sm:$0xff]
        %v566 = vld [vmem:[%s4 + $0x20] sm:$0xff]
        %v567 = vld [vmem:[%s4 + $0x28] sm:$0xff]
        %v568 = vld [vmem:[%s4 + $0x30] sm:$0xff]
        %v569 = vld [vmem:[%s4 + $0x38] sm:$0xff]
        %v570 = vld [vmem:[%s5] sm:$0x1]
        %v572 = vlaneseq
        %v573 = vshrl.u32 %v572, 7
        %v574 = vsub.s32 0, %v573
        %v575 = vrot.slane %v570, %v574
        %vm577 = vcmask 523264
        %v579 = vsel %vm577, %v561, 0
        %581 = vmatprep.subr.mxu0 0.0
        %582 = vmatpush1.msra.mxu0 %v562
        %583 = vmatprep.subr.mxu0 0.0
        %584 = vmatpush1.msra.mxu0 %v563
        %585 = vmatprep.subr.mxu0 0.0
        %586 = vmatpush1.msra.mxu0 %v564
        %587 = vmatprep.subr.mxu0 0.0
        %588 = vmatpush1.msra.mxu0 %v565
        %589 = vmatprep.subr.mxu0 0.0
        %590 = vmatpush1.msra.mxu0 %v566
        %591 = vmatprep.subr.mxu0 0.0
        %592 = vmatpush1.msra.mxu0 %v567
        %593 = vmatprep.subr.mxu0 0.0
        %594 = vmatpush1.msra.mxu0 %v568
        %595 = vmatprep.subr.mxu0 0.0
        %596 = vmatpush1.msra.mxu0 %v569
        %597 = vmatprep.subr.mxu0 0.0
        %598 = vmatpush1.msra.mxu0 0.0
        %599 = vmatprep.subr.mxu0 0.0
        %600 = vmatpush1.msra.mxu0 0.0
        %601 = vmatprep.subr.mxu0 0.0
        %602 = vmatpush1.msra.mxu0 0.0
        %603 = vmatprep.subr.mxu0 0.0
        %604 = vmatpush1.msra.mxu0 0.0
        %605 = vmatprep.subr.mxu0 0.0
        %606 = vmatpush1.msra.mxu0 0.0
        %607 = vmatprep.subr.mxu0 0.0
        %608 = vmatpush1.msra.mxu0 0.0
        %609 = vmatprep.subr.mxu0 0.0
        %610 = vmatpush1.msra.mxu0 0.0
        %611 = vmatprep.subr.mxu0 0.0
        %612 = vmatpush1.msra.mxu0 0.0
        %613 = vmatprep.subr.mxu0 0.0
        %614 = vmatpush1.msra.mxu0 0.0
        %615 = vmatprep.subr.mxu0 0.0
        %616 = vmatpush1.msra.mxu0 0.0
        %617 = vmatprep.subr.mxu0 0.0
        %618 = vmatpush1.msra.mxu0 0.0
        %619 = vmatprep.subr.mxu0 0.0
        %620 = vmatpush1.msra.mxu0 0.0
        %621 = vmatprep.subr.mxu0 0.0
        %622 = vmatpush1.msra.mxu0 0.0
        %623 = vmatprep.subr.mxu0 0.0
        %624 = vmatpush1.msra.mxu0 0.0
        %625 = vmatprep.subr.mxu0 0.0
        %626 = vmatpush1.msra.mxu0 0.0
        %627 = vmatprep.subr.mxu0 0.0
        %628 = vmatpush1.msra.mxu0 0.0
        %629 = vmatprep.subr.mxu0 0.0
        %630 = vmatpush1.msra.mxu0 0.0
        %631 = vmatprep.subr.mxu0 0.0
        %632 = vmatpush1.msra.mxu0 0.0
        %633 = vmatprep.subr.mxu0 0.0
        %634 = vmatpush1.msra.mxu0 0.0
        %635 = vmatprep.subr.mxu0 0.0
        %636 = vmatpush1.msra.mxu0 0.0
        %637 = vmatprep.subr.mxu0 0.0
        %638 = vmatpush1.msra.mxu0 0.0
        %639 = vmatprep.subr.mxu0 0.0
        %640 = vmatpush1.msra.mxu0 0.0
        %641 = vmatprep.subr.mxu0 0.0
        %642 = vmatpush1.msra.mxu0 0.0
        %643 = vmatprep.subr.mxu0 0.0
        %644 = vmatpush1.msra.mxu0 0.0
        %645 = vmatprep.mubr.f32.mxu0 0.0
        %646 = vmatmul.mubr.f32.gmra.mrb[0].mxu0 %v579
        %v647 = vpop.f32.mrb[0].mxu0
        %v648 = vadd.f32 %v575, %v647
        %v649 = vpop.f32.mrb[0].mxu0
        %650 = vdwg.mxu0
        %v651 = vmax.f32 %v648, 0.0
        %v652 = vld [vmem:[%s6] sm:$0xff]
        %v653 = vld [vmem:[%s6 + $0x8] sm:$0xff]
        %v654 = vld [vmem:[%s6 + $0x10] sm:$0xff]
        %v655 = vld [vmem:[%s6 + $0x18] sm:$0xff]
        %v656 = vld [vmem:[%s6 + $0x20] sm:$0xff]
        %v657 = vld [vmem:[%s6 + $0x28] sm:$0xff]
        %v658 = vld [vmem:[%s6 + $0x30] sm:$0xff]
        %v659 = vld [vmem:[%s6 + $0x38] sm:$0xff]
        %v660 = vld [vmem:[%s7] sm:$0x1]
        %v662 = vlaneseq
        %v663 = vshrl.u32 %v662, 7
        %v664 = vsub.s32 0, %v663
        %v665 = vrot.slane %v660, %v664
        %v668 = vsel %vm577, %v651, 0
        %670 = vmatprep.subr.mxu0 0.0
        %671 = vmatpush1.msra.mxu0 %v652
        %672 = vmatprep.subr.mxu0 0.0
        %673 = vmatpush1.msra.mxu0 %v653
        %674 = vmatprep.subr.mxu0 0.0
        %675 = vmatpush1.msra.mxu0 %v654
        %676 = vmatprep.subr.mxu0 0.0
        %677 = vmatpush1.msra.mxu0 %v655
        %678 = vmatprep.subr.mxu0 0.0
        %679 = vmatpush1.msra.mxu0 %v656
        %680 = vmatprep.subr.mxu0 0.0
        %681 = vmatpush1.msra.mxu0 %v657
        %682 = vmatprep.subr.mxu0 0.0
        %683 = vmatpush1.msra.mxu0 %v658
        %684 = vmatprep.subr.mxu0 0.0
        %685 = vmatpush1.msra.mxu0 %v659
        %686 = vmatprep.subr.mxu0 0.0
        %687 = vmatpush1.msra.mxu0 0.0
        %688 = vmatprep.subr.mxu0 0.0
        %689 = vmatpush1.msra.mxu0 0.0
        %690 = vmatprep.subr.mxu0 0.0
        %691 = vmatpush1.msra.mxu0 0.0
        %692 = vmatprep.subr.mxu0 0.0
        %693 = vmatpush1.msra.mxu0 0.0
        %694 = vmatprep.subr.mxu0 0.0
        %695 = vmatpush1.msra.mxu0 0.0
        %696 = vmatprep.subr.mxu0 0.0
        %697 = vmatpush1.msra.mxu0 0.0
        %698 = vmatprep.subr.mxu0 0.0
        %699 = vmatpush1.msra.mxu0 0.0
        %700 = vmatprep.subr.mxu0 0.0
        %701 = vmatpush1.msra.mxu0 0.0
        %702 = vmatprep.subr.mxu0 0.0
        %703 = vmatpush1.msra.mxu0 0.0
        %704 = vmatprep.subr.mxu0 0.0
        %705 = vmatpush1.msra.mxu0 0.0
        %706 = vmatprep.subr.mxu0 0.0
        %707 = vmatpush1.msra.mxu0 0.0
        %708 = vmatprep.subr.mxu0 0.0
        %709 = vmatpush1.msra.mxu0 0.0
        %710 = vmatprep.subr.mxu0 0.0
        %711 = vmatpush1.msra.mxu0 0.0
        %712 = vmatprep.subr.mxu0 0.0
        %713 = vmatpush1.msra.mxu0 0.0
        %714 = vmatprep.subr.mxu0 0.0
        %715 = vmatpush1.msra.mxu0 0.0
        %716 = vmatprep.subr.mxu0 0.0
        %717 = vmatpush1.msra.mxu0 0.0
        %718 = vmatprep.subr.mxu0 0.0
        %719 = vmatpush1.msra.mxu0 0.0
        %720 = vmatprep.subr.mxu0 0.0
        %721 = vmatpush1.msra.mxu0 0.0
        %722 = vmatprep.subr.mxu0 0.0
        %723 = vmatpush1.msra.mxu0 0.0
        %724 = vmatprep.subr.mxu0 0.0
        %725 = vmatpush1.msra.mxu0 0.0
        %726 = vmatprep.subr.mxu0 0.0
        %727 = vmatpush1.msra.mxu0 0.0
        %728 = vmatprep.subr.mxu0 0.0
        %729 = vmatpush1.msra.mxu0 0.0
        %730 = vmatprep.subr.mxu0 0.0
        %731 = vmatpush1.msra.mxu0 0.0
        %732 = vmatprep.subr.mxu0 0.0
        %733 = vmatpush1.msra.mxu0 0.0
        %734 = vmatprep.mubr.f32.mxu0 0.0
        %735 = vmatmul.mubr.f32.gmra.mrb[0].mxu0 %v668
        %v736 = vpop.f32.mrb[0].mxu0
        %v737 = vadd.f32 %v665, %v736
        %v738 = vpop.f32.mrb[0].mxu0
        %739 = vdwg.mxu0
        %v740 = vld [vmem:[%s475] sm:$0x1]
        %v741 = vld [vmem:[%s8] sm:$0xff]
        %v742 = vld [vmem:[%s8 + $0x8] sm:$0xff]
        %v743 = vld [vmem:[%s8 + $0x10] sm:$0xff]
        %v744 = vld [vmem:[%s8 + $0x18] sm:$0xff]
        %v746 = vlaneseq
        %v747 = vshrl.u32 %v746, 7
        %v748 = vsub.s32 0, %v747
        %v749 = vrot.slane %v740, %v748
        %vm751 = vcmask 261120
        %v753 = vsel %vm751, %v737, 0
        %755 = vmatprep.subr.mxu0 0.0
        %756 = vmatpush1.msra.mxu0 %v741
        %757 = vmatprep.subr.mxu0 0.0
        %758 = vmatpush1.msra.mxu0 %v742
        %759 = vmatprep.subr.mxu0 0.0
        %760 = vmatpush1.msra.mxu0 %v743
        %761 = vmatprep.subr.mxu0 0.0
        %762 = vmatpush1.msra.mxu0 %v744
        %763 = vmatprep.subr.mxu0 0.0
        %764 = vmatpush1.msra.mxu0 0.0
        %765 = vmatprep.subr.mxu0 0.0
        %766 = vmatpush1.msra.mxu0 0.0
        %767 = vmatprep.subr.mxu0 0.0
        %768 = vmatpush1.msra.mxu0 0.0
        %769 = vmatprep.subr.mxu0 0.0
        %770 = vmatpush1.msra.mxu0 0.0
        %771 = vmatprep.subr.mxu0 0.0
        %772 = vmatpush1.msra.mxu0 0.0
        %773 = vmatprep.subr.mxu0 0.0
        %774 = vmatpush1.msra.mxu0 0.0
        %775 = vmatprep.subr.mxu0 0.0
        %776 = vmatpush1.msra.mxu0 0.0
        %777 = vmatprep.subr.mxu0 0.0
        %778 = vmatpush1.msra.mxu0 0.0
        %779 = vmatprep.subr.mxu0 0.0
        %780 = vmatpush1.msra.mxu0 0.0
        %781 = vmatprep.subr.mxu0 0.0
        %782 = vmatpush1.msra.mxu0 0.0
        %783 = vmatprep.subr.mxu0 0.0
        %784 = vmatpush1.msra.mxu0 0.0
        %785 = vmatprep.subr.mxu0 0.0
        %786 = vmatpush1.msra.mxu0 0.0
        %787 = vmatprep.subr.mxu0 0.0
        %788 = vmatpush1.msra.mxu0 0.0
        %789 = vmatprep.subr.mxu0 0.0
        %790 = vmatpush1.msra.mxu0 0.0
        %791 = vmatprep.subr.mxu0 0.0
        %792 = vmatpush1.msra.mxu0 0.0
        %793 = vmatprep.subr.mxu0 0.0
        %794 = vmatpush1.msra.mxu0 0.0
        %795 = vmatprep.subr.mxu0 0.0
        %796 = vmatpush1.msra.mxu0 0.0
        %797 = vmatprep.subr.mxu0 0.0
        %798 = vmatpush1.msra.mxu0 0.0
        %799 = vmatprep.subr.mxu0 0.0
        %800 = vmatpush1.msra.mxu0 0.0
        %801 = vmatprep.subr.mxu0 0.0
        %802 = vmatpush1.msra.mxu0 0.0
        %803 = vmatprep.subr.mxu0 0.0
        %804 = vmatpush1.msra.mxu0 0.0
        %805 = vmatprep.subr.mxu0 0.0
        %806 = vmatpush1.msra.mxu0 0.0
        %807 = vmatprep.subr.mxu0 0.0
        %808 = vmatpush1.msra.mxu0 0.0
        %809 = vmatprep.subr.mxu0 0.0
        %810 = vmatpush1.msra.mxu0 0.0
        %811 = vmatprep.subr.mxu0 0.0
        %812 = vmatpush1.msra.mxu0 0.0
        %813 = vmatprep.subr.mxu0 0.0
        %814 = vmatpush1.msra.mxu0 0.0
        %815 = vmatprep.subr.mxu0 0.0
        %816 = vmatpush1.msra.mxu0 0.0
        %817 = vmatprep.subr.mxu0 0.0
        %818 = vmatpush1.msra.mxu0 0.0
        %819 = vmatprep.mubr.f32.mxu0 0.0
        %820 = vmatmul.mubr.f32.gmra.mrb[0].mxu0 %v753
        %v821 = vpop.f32.mrb[0].mxu0
        %v822 = vadd.f32 %v749, %v821
        %v823 = vpop.f32.mrb[0].mxu0
        %824 = vdwg.mxu0
        %v825 = vmax.f32 %v822, 0.0
        %v826 = vld [vmem:[%s9] sm:$0xff]
        %v827 = vld [vmem:[%s9 + $0x8] sm:$0xff]
        %v828 = vld [vmem:[%s9 + $0x10] sm:$0xff]
        %v829 = vld [vmem:[%s9 + $0x18] sm:$0xff]
        %v830 = vld [vmem:[%s9 + $0x20] sm:$0xff]
        %v831 = vld [vmem:[%s9 + $0x28] sm:$0xff]
        %v832 = vld [vmem:[%s9 + $0x30] sm:$0xff]
        %v833 = vld [vmem:[%s9 + $0x38] sm:$0xff]
        %v834 = vld [vmem:[%s9 + $0x40] sm:$0xff]
        %v835 = vld [vmem:[%s9 + $0x48] sm:$0xff]
        %v836 = vld [vmem:[%s9 + $0x50] sm:$0xff]
        %v837 = vld [vmem:[%s9 + $0x58] sm:$0xff]
        %v838 = vld [vmem:[%s9 + $0x60] sm:$0xff]
        %v839 = vld [vmem:[%s9 + $0x68] sm:$0xff]
        %v840 = vld [vmem:[%s9 + $0x70] sm:$0xff]
        %v841 = vld [vmem:[%s9 + $0x78] sm:$0xff]
        %v842 = vld [vmem:[%s10] sm:$0x1]
        %v844 = vlaneseq
        %v845 = vshrl.u32 %v844, 7
        %v846 = vsub.s32 0, %v845
        %v847 = vrot.slane %v842, %v846
        %849 = vmatprep.subr.mxu0 0.0
        %850 = vmatpush1.msra.mxu0 %v826
        %851 = vmatprep.subr.mxu0 0.0
        %852 = vmatpush1.msra.mxu0 %v827
        %853 = vmatprep.subr.mxu0 0.0
        %854 = vmatpush1.msra.mxu0 %v828
        %855 = vmatprep.subr.mxu0 0.0
        %856 = vmatpush1.msra.mxu0 %v829
        %857 = vmatprep.subr.mxu0 0.0
        %858 = vmatpush1.msra.mxu0 %v830
        %859 = vmatprep.subr.mxu0 0.0
        %860 = vmatpush1.msra.mxu0 %v831
        %861 = vmatprep.subr.mxu0 0.0
        %862 = vmatpush1.msra.mxu0 %v832
        %863 = vmatprep.subr.mxu0 0.0
        %864 = vmatpush1.msra.mxu0 %v833
        %865 = vmatprep.subr.mxu0 0.0
        %866 = vmatpush1.msra.mxu0 %v834
        %867 = vmatprep.subr.mxu0 0.0
        %868 = vmatpush1.msra.mxu0 %v835
        %869 = vmatprep.subr.mxu0 0.0
        %870 = vmatpush1.msra.mxu0 %v836
        %871 = vmatprep.subr.mxu0 0.0
        %872 = vmatpush1.msra.mxu0 %v837
        %873 = vmatprep.subr.mxu0 0.0
        %874 = vmatpush1.msra.mxu0 %v838
        %875 = vmatprep.subr.mxu0 0.0
        %876 = vmatpush1.msra.mxu0 %v839
        %877 = vmatprep.subr.mxu0 0.0
        %878 = vmatpush1.msra.mxu0 %v840
        %879 = vmatprep.subr.mxu0 0.0
        %880 = vmatpush1.msra.mxu0 %v841
        %881 = vmatprep.subr.mxu0 0.0
        %882 = vmatpush1.msra.mxu0 0.0
        %883 = vmatprep.subr.mxu0 0.0
        %884 = vmatpush1.msra.mxu0 0.0
        %885 = vmatprep.subr.mxu0 0.0
        %886 = vmatpush1.msra.mxu0 0.0
        %887 = vmatprep.subr.mxu0 0.0
        %888 = vmatpush1.msra.mxu0 0.0
        %889 = vmatprep.subr.mxu0 0.0
        %890 = vmatpush1.msra.mxu0 0.0
        %891 = vmatprep.subr.mxu0 0.0
        %892 = vmatpush1.msra.mxu0 0.0
        %893 = vmatprep.subr.mxu0 0.0
        %894 = vmatpush1.msra.mxu0 0.0
        %895 = vmatprep.subr.mxu0 0.0
        %896 = vmatpush1.msra.mxu0 0.0
        %897 = vmatprep.subr.mxu0 0.0
        %898 = vmatpush1.msra.mxu0 0.0
        %899 = vmatprep.subr.mxu0 0.0
        %900 = vmatpush1.msra.mxu0 0.0
        %901 = vmatprep.subr.mxu0 0.0
        %902 = vmatpush1.msra.mxu0 0.0
        %903 = vmatprep.subr.mxu0 0.0
        %904 = vmatpush1.msra.mxu0 0.0
        %905 = vmatprep.subr.mxu0 0.0
        %906 = vmatpush1.msra.mxu0 0.0
        %907 = vmatprep.subr.mxu0 0.0
        %908 = vmatpush1.msra.mxu0 0.0
        %909 = vmatprep.subr.mxu0 0.0
        %910 = vmatpush1.msra.mxu0 0.0
        %911 = vmatprep.subr.mxu0 0.0
        %912 = vmatpush1.msra.mxu0 0.0
        %913 = vmatprep.mubr.f32.mxu0 0.0
        %914 = vmatmul.mubr.f32.gmra.mrb[0].mxu0 %v825
        %v915 = vpop.f32.mrb[0].mxu0
        %v916 = vadd.f32 %v847, %v915
        %v917 = vpop.f32.mrb[0].mxu0
        %918 = vdwg.mxu0
        %v919 = vmax.f32 %v916, 0.0
        %v920 = vld [vmem:[%s11] sm:$0x1]
        %v921 = vld [vmem:[#allocation2] sm:$0x1]
        %923 = vset.pattern.permute.xlu0 0
        %924 = vperm.xlu0 %923, %v921
        %v925 = vpop.permute.xlu0 %924
        %v927 = vlaneseq
        %v928 = vshrl.u32 %v927, 7
        %v929 = vsub.s32 0, %v928
        %v930 = vrot.slane %v925, %v929
        %v932 = vsel %vm577, %v920, 0
        %v935 = vsel %vm577, %v919, 0
        %937 = vmatprep.subr.mxu0 0.0
        %938 = vmatpush1.xpose.msra.mxu0 %v935
        %939 = vmatprep.subr.mxu0 0.0
        %940 = vmatpush1.xpose.msra.mxu0 0.0
        %941 = vmatprep.subr.mxu0 0.0
        %942 = vmatpush1.xpose.msra.mxu0 0.0
        %943 = vmatprep.subr.mxu0 0.0
        %944 = vmatpush1.xpose.msra.mxu0 0.0
        %945 = vmatprep.subr.mxu0 0.0
        %946 = vmatpush1.xpose.msra.mxu0 0.0
        %947 = vmatprep.subr.mxu0 0.0
        %948 = vmatpush1.xpose.msra.mxu0 0.0
        %949 = vmatprep.subr.mxu0 0.0
        %950 = vmatpush1.xpose.msra.mxu0 0.0
        %951 = vmatprep.subr.mxu0 0.0
        %952 = vmatpush1.xpose.msra.mxu0 0.0
        %953 = vmatprep.subr.mxu0 0.0
        %954 = vmatpush1.xpose.msra.mxu0 0.0
        %955 = vmatprep.subr.mxu0 0.0
        %956 = vmatpush1.xpose.msra.mxu0 0.0
        %957 = vmatprep.subr.mxu0 0.0
        %958 = vmatpush1.xpose.msra.mxu0 0.0
        %959 = vmatprep.subr.mxu0 0.0
        %960 = vmatpush1.xpose.msra.mxu0 0.0
        %961 = vmatprep.subr.mxu0 0.0
        %962 = vmatpush1.xpose.msra.mxu0 0.0
        %963 = vmatprep.subr.mxu0 0.0
        %964 = vmatpush1.xpose.msra.mxu0 0.0
        %965 = vmatprep.subr.mxu0 0.0
        %966 = vmatpush1.xpose.msra.mxu0 0.0
        %967 = vmatprep.subr.mxu0 0.0
        %968 = vmatpush1.xpose.msra.mxu0 0.0
        %969 = vmatprep.subr.mxu0 0.0
        %970 = vmatpush1.xpose.msra.mxu0 0.0
        %971 = vmatprep.subr.mxu0 0.0
        %972 = vmatpush1.xpose.msra.mxu0 0.0
        %973 = vmatprep.subr.mxu0 0.0
        %974 = vmatpush1.xpose.msra.mxu0 0.0
        %975 = vmatprep.subr.mxu0 0.0
        %976 = vmatpush1.xpose.msra.mxu0 0.0
        %977 = vmatprep.subr.mxu0 0.0
        %978 = vmatpush1.xpose.msra.mxu0 0.0
        %979 = vmatprep.subr.mxu0 0.0
        %980 = vmatpush1.xpose.msra.mxu0 0.0
        %981 = vmatprep.subr.mxu0 0.0
        %982 = vmatpush1.xpose.msra.mxu0 0.0
        %983 = vmatprep.subr.mxu0 0.0
        %984 = vmatpush1.xpose.msra.mxu0 0.0
        %985 = vmatprep.subr.mxu0 0.0
        %986 = vmatpush1.xpose.msra.mxu0 0.0
        %987 = vmatprep.subr.mxu0 0.0
        %988 = vmatpush1.xpose.msra.mxu0 0.0
        %989 = vmatprep.subr.mxu0 0.0
        %990 = vmatpush1.xpose.msra.mxu0 0.0
        %991 = vmatprep.subr.mxu0 0.0
        %992 = vmatpush1.xpose.msra.mxu0 0.0
        %993 = vmatprep.subr.mxu0 0.0
        %994 = vmatpush1.xpose.msra.mxu0 0.0
        %995 = vmatprep.subr.mxu0 0.0
        %996 = vmatpush1.xpose.msra.mxu0 0.0
        %997 = vmatprep.subr.mxu0 0.0
        %998 = vmatpush1.xpose.msra.mxu0 0.0
        %999 = vmatprep.subr.mxu0 0.0
        %1000 = vmatpush1.xpose.msra.mxu0 0.0
        %1001 = vmatprep.mubr.f32.mxu0 0.0
        %1002 = vmatmul.mubr.f32.gmra.mrb[0].mxu0 %v932
        %v1003 = vpop.f32.mrb[0].mxu0
        %v1004 = vadd.f32 %v930, %v1003
        %v1005 = vpop.f32.mrb[0].mxu0
        %1006 = vdwg.mxu0
        %vm1007 = vcmask 57344
        %1008 = vst.msk [vmem:[%s465] sm:$0x1] %vm1007, %v1004
        %s1009 = sand.u32 %s336, 1
        %s1010 = scalar_lea.sflag [#allocation4], %s1009
        %s1011 = sand.u32 %s336, 1
        %s1012 = scalar_lea.vmem [#allocation3], %s1011
        // Predicated region
        $region73: #{sbi_network_forward.3} parent=71 // pred_check
          %p1013 = pneg %p346
        $region74: #{sbi_network_forward.3} parent=71 // pred_check_branch
          %1015 = sbr.rel (%p1013) target = $region76
        $region75: #{sbi_network_forward.3} parent=71 // pred_region
          %s1017 = ssub.s32 16, 16
          %1018 = vsyncadd %s1010, %s1017
          %s1019 = sadd.s32 %s34, %s33
          %s1020 = smul.addr %s1019, 16
          %s1021 = scalar_lea.hbm %s13, %s1020
          %s1023 = sshll.u32 %s1012, 4
          %s1024 = int_to_ptr.vmem [resolvable:$true] %s1023
          %1026 = dma.vmem_to_hbm [thread:$0]  %s1024, 16, %s1021, %s1010
        $region76: #{sbi_network_forward.3} parent=71 // pred_fallthru
          _
      $region72: #{sbi_network_forward.3} parent=5 // pred_fallthru
        _
      %p1027 = scmp.le.s32.totalorder 2, %s24
      // Predicated region
      $region77: #{sbi_network_forward.3} parent=5 // pred_check
        %p1028 = pneg %p1027
      $region78: #{sbi_network_forward.3} parent=5 // pred_check_branch
        %1030 = sbr.rel (%p1028) target = $region80
      $region79: #{sbi_network_forward.3} parent=5 // pred_region
        %s1031 = ssub.s32 %s24, 2
        // Predicated region
        $region81: #{sbi_network_forward.3} parent=79 // pred_check
          %p1032 = pneg %p352
        $region82: #{sbi_network_forward.3} parent=79 // pred_check_branch
          %1034 = sbr.rel (%p1032) target = $region84
        $region83: #{sbi_network_forward.3} parent=79 // pred_region
          %s1035 = sand.u32 %s337, 1
          %s1036 = scalar_lea.sflag [#allocation4], %s1035
          %s1037 = sand.u32 %s337, 1
          %s1038 = scalar_lea.vmem [#allocation3], %s1037
          %1039 = dma.done %s1036, 16
        $region84: #{sbi_network_forward.3} parent=79 // pred_fallthru
          _
      $region80: #{sbi_network_forward.3} parent=5 // pred_fallthru
        _
    $region6: #{sbi_network_forward.3} parent=1 // loop_footer
      %s28 = sadd.s32 1, %s24
    $region7: #{sbi_network_forward.3} parent=1 // loop_footer_branch
      %23 = sbr.rel target = $region3
    $region8: #{sbi_network_forward.3} parent=1 // loop_exit
      _
    %1040 = vsyncpa [#allocation4], 1
    %s1041 = scalar_lea.sflag [#allocation4], 1
    %1042 = vsyncpa %s1041, 1

</llo_original>
